<compile_context>
chip_gen: v6e
topology: v6e:2x2x1
jax: 0.10.0
libtpu: 0.0.40
codegen_flags: <defaults>
</compile_context>

<pallas_src>
import numpy as np
import jax
import jax.numpy as jnp
from jax.experimental import pallas as pl
from jax.experimental.pallas import tpu as pltpu

# ----- config (small, consistent with the module) --------------------------
B, T, P = 2, 8, 16        # batch, block_size, patch feature dim
D = 32                    # cfg.action_encoder.latent_dim (= d_model)
H = 4                     # nhead
DH = D // H
FF = 64                   # dim_feedforward
L = 2                     # cfg.transformer.num_layers
S = 3 * T + 1             # real sequence length (ctx + patches + actions + poses) = 25
S_PAD = 32                # token rows padded up to a sublane multiple
F_PAD = 32                # packed raw-feature width (16 + 2 + 6 = 24, padded)
EPS = 1e-5                # torch LayerNorm default eps
WSLAB_COLS = 128          # lane width of the packed weight slab


# ----- packed weight-slab layout (static, shared by host packer & kernel) ---
def _build_layout():
    specs = [("emb_w", F_PAD, D), ("bias_pos", S_PAD, D), ("vmask", H * S_PAD, D)]
    for l in range(L):
        specs += [(f"win{l}", D, 3 * D), (f"wout{l}", D, D),
                  (f"w1{l}", D, FF), (f"w2t{l}", D, FF)]          # w2 stored transposed
    specs += [("chw", D, D)]
    for l in range(L):
        specs += [(f"band{l}", 8, WSLAB_COLS)]                    # per-layer bias/LN band
    specs += [("fband", 8, WSLAB_COLS)]                           # lnw / lnb / chb
    off, r = {}, 0
    for name, rows, cols in specs:
        off[name] = (r, rows, cols)
        r += rows
    return off, r


_OFF, WSLAB_ROWS = _build_layout()


# ----- host-side packing ----------------------------------------------------
def pack_weights(prm):
    """All module parameters -> one lane-padded f32 slab (single kernel operand)."""
    slab = np.zeros((WSLAB_ROWS, WSLAB_COLS), np.float32)
    inv_scale = 1.0 / np.sqrt(np.float32(DH))

    def put(name, arr):
        arr = np.asarray(arr, np.float32)
        r0, rows, cols = _OFF[name]
        assert arr.shape == (rows, cols), (name, arr.shape, (rows, cols))
        slab[r0:r0 + rows, 0:cols] = arr

    # combined embedding weight: block rows for [patch | action | pose] features
    emb_w = np.zeros((F_PAD, D), np.float32)
    emb_w[0:P] = np.asarray(prm["wp"])
    emb_w[P:P + 2] = np.asarray(prm["wa"])
    emb_w[P + 2:P + 8] = np.asarray(prm["wq"])
    put("emb_w", emb_w)

    # per-token additive term: ctx token / embedding biases + positional encoding
    bias_pos = np.zeros((S_PAD, D), np.float32)
    pos = np.asarray(prm["pos"], np.float32)
    bias_pos[0] = np.asarray(prm["ctx"])[0] + pos[0]
    bias_pos[1:T + 1] = np.asarray(prm["bp"])[0] + pos[1:T + 1]
    bias_pos[T + 1:2 * T + 1] = np.asarray(prm["ba"])[0] + pos[T + 1:2 * T + 1]
    bias_pos[2 * T + 1:3 * T + 1] = np.asarray(prm["bq"])[0] + pos[2 * T + 1:3 * T + 1]
    put("bias_pos", bias_pos)

    # static head-separation + key-padding mask (block-diagonal K/V expansion operand)
    vmask = np.zeros((H * S_PAD, D), np.float32)
    for h in range(H):
        vmask[h * S_PAD:h * S_PAD + S, h * DH:(h + 1) * DH] = 1.0
    put("vmask", vmask)

    for l in range(L):
        win = np.asarray(prm["inw"][l], np.float32).copy()
        win[:, :D] *= inv_scale                                   # fold 1/sqrt(DH) into Q cols
        put(f"win{l}", win)
        put(f"wout{l}", prm["outw"][l])
        put(f"w1{l}", prm["l1w"][l])
        put(f"w2t{l}", np.asarray(prm["l2w"][l], np.float32).T)   # transposed -> fewer slab rows

        band = np.zeros((8, WSLAB_COLS), np.float32)
        binl = np.asarray(prm["inb"][l], np.float32).copy()
        binl[:, :D] *= inv_scale                                  # scale folded into Q bias too
        band[0, :3 * D] = binl[0]
        band[1, :D] = np.asarray(prm["outb"][l])[0]
        band[2, :D] = np.asarray(prm["n1w"][l])[0]
        band[3, :D] = np.asarray(prm["n1b"][l])[0]
        band[4, :FF] = np.asarray(prm["l1b"][l])[0]
        band[5, :D] = np.asarray(prm["l2b"][l])[0]
        band[6, :D] = np.asarray(prm["n2w"][l])[0]
        band[7, :D] = np.asarray(prm["n2b"][l])[0]
        put(f"band{l}", band)

    put("chw", prm["chw"])
    fband = np.zeros((8, WSLAB_COLS), np.float32)
    fband[0, :D] = np.asarray(prm["lnw"])[0]
    fband[1, :D] = np.asarray(prm["lnb"])[0]
    fband[2, :D] = np.asarray(prm["chb"])[0]
    put("fband", fband)
    return jnp.asarray(slab)


def pack_inputs(patches, actions, pose):
    """patches/actions/pose -> one structured (B, S_PAD, F_PAD) slab (single input DMA)."""
    b = patches.shape[0]
    feat = jnp.zeros((b, S_PAD, F_PAD), jnp.float32)
    feat = feat.at[:, 1:T + 1, 0:P].set(patches.astype(jnp.float32))
    feat = feat.at[:, T + 1:2 * T + 1, P:P + 2].set(actions.astype(jnp.float32))
    feat = feat.at[:, 2 * T + 1:3 * T + 1, P + 2:P + 8].set(pose.astype(jnp.float32))
    return feat


# ----- kernel ---------------------------------------------------------------
def _ln(x, w, b):
    mu = jnp.mean(x, axis=-1, keepdims=True)
    xc = x - mu
    var = jnp.mean(xc * xc, axis=-1, keepdims=True)
    return xc * jax.lax.rsqrt(var + EPS) * w + b


def _make_kernel(BB):
    R = BB * S_PAD                              # batch elements of this grid step, stacked in rows
    CT_DN = (((1,), (1,)), ((), ()))            # contract dim1 with dim1:  A @ B^T

    def kernel(feat_ref, w_ref, out_ref):
        def wslice(name):
            r0, rows, cols = _OFF[name]
            return w_ref[r0:r0 + rows, 0:cols]

        vmask = wslice("vmask")                                   # (H*S_PAD, D), static 0/1

        # tokens: one matmul + one broadcast add (patch/action/pose embeddings, their biases,
        # the ctx token and the positional encoding all folded into emb_w / bias_pos)
        feat = feat_ref[...].reshape(R, F_PAD)
        x = jnp.dot(feat, wslice("emb_w"), preferred_element_type=jnp.float32)
        x = (x.reshape(BB, S_PAD, D) + wslice("bias_pos")[None, :, :]).reshape(R, D)

        for l in range(L):                      # static-unrolled post-LN encoder layers (relu FFN)
            band = wslice(f"band{l}")           # one (8,128) load/layer, row-sliced in-register
            bin_ = band[0:1, 0:3 * D]; bout = band[1:2, 0:D]
            n1w = band[2:3, 0:D];      n1b = band[3:4, 0:D]
            b1 = band[4:5, 0:FF];      b2 = band[5:6, 0:D]
            n2w = band[6:7, 0:D];      n2b = band[7:8, 0:D]

            qkv = jnp.dot(x, wslice(f"win{l}"), preferred_element_type=jnp.float32) + bin_
            q = qkv[:, 0:D]; k = qkv[:, D:2 * D]; v = qkv[:, 2 * D:3 * D]        # (R, D)

            # Per-batch attention with a block-diagonal K/V expansion:
            #   KM[h*S+k, d] = K[k, d] * (d in head h) * (k < 25)
            # so Q @ KM^T gives ALL per-head scores lane-dense in one (32,128) matmul, and the
            # softmax numerator / denominator are plain matmuls against VM / vmask.  Padded keys
            # contribute exactly zero to both (no -1e30 additive mask needed), and the folded-in
            # 1/sqrt(DH) scale means no score multiply.
            outs = []
            for b in range(BB):
                qb = q[b * S_PAD:(b + 1) * S_PAD, :]
                kb = k[b * S_PAD:(b + 1) * S_PAD, :]
                vb = v[b * S_PAD:(b + 1) * S_PAD, :]
                km = jnp.broadcast_to(kb[None], (H, S_PAD, D)).reshape(H * S_PAD, D) * vmask
                vm = jnp.broadcast_to(vb[None], (H, S_PAD, D)).reshape(H * S_PAD, D) * vmask
                s = jax.lax.dot_general(qb, km, CT_DN,
                                        preferred_element_type=jnp.float32)      # (S_PAD, H*S_PAD)
                p_ = jnp.exp(s - jnp.max(s, axis=-1, keepdims=True))
                num = jnp.dot(p_, vm, preferred_element_type=jnp.float32)        # (S_PAD, D)
                den = jnp.dot(p_, vmask, preferred_element_type=jnp.float32)     # (S_PAD, D)
                outs.append(num * pl.reciprocal(den, approx=True))
            attn = outs[0] if BB == 1 else jnp.concatenate(outs, axis=0)          # (R, D)

            attn = jnp.dot(attn, wslice(f"wout{l}"), preferred_element_type=jnp.float32) + bout
            x = _ln(x + attn, n1w, n1b)
            ff = jnp.maximum(
                jnp.dot(x, wslice(f"w1{l}"), preferred_element_type=jnp.float32) + b1, 0.0)
            ff = jax.lax.dot_general(ff, wslice(f"w2t{l}"), CT_DN,
                                     preferred_element_type=jnp.float32) + b2
            x = _ln(x + ff, n2w, n2b)

        # final LayerNorm + ctx head on token 0 of every (folded) batch element
        fband = wslice("fband")
        x = _ln(x, fband[0:1, 0:D], fband[1:2, 0:D])
        ctx = x.reshape(BB, S_PAD, D)[:, 0, :]                                    # (BB, D)
        res = jnp.dot(ctx, wslice("chw"), preferred_element_type=jnp.float32) + fband[2:3, 0:D]
        out_ref[...] = res.reshape(BB, 1, D)                                      # single store

    return kernel


# ----- wrapper ---------------------------------------------------------------
def build_forward(batch_per_step, core_parallel=False):
    BB = int(batch_per_step)
    assert B % BB == 0
    kernel = _make_kernel(BB)
    semantics = (pltpu.CORE_PARALLEL,) if core_parallel else ("parallel",)

    call = pl.pallas_call(
        kernel,
        out_shape=jax.ShapeDtypeStruct((B, 1, D), jnp.float32),
        grid_spec=pltpu.PrefetchScalarGridSpec(
            num_scalar_prefetch=0,
            grid=(B // BB,),
            in_specs=[
                pl.BlockSpec((BB, S_PAD, F_PAD), lambda g: (g, 0, 0)),
                pl.BlockSpec((WSLAB_ROWS, WSLAB_COLS), lambda g: (0, 0)),   # constant weight slab
            ],
            out_specs=pl.BlockSpec((BB, 1, D), lambda g: (g, 0, 0)),
        ),
        compiler_params=pltpu.CompilerParams(dimension_semantics=semantics),
    )

    @jax.jit
    def forward(patches, actions, pose, wslab):
        feat = pack_inputs(patches, actions, pose)
        out = call(feat, wslab)          # (B, 1, D)
        return out[:, 0, :]              # (B, D) ctx_pred

    return forward


def pick_config():
    """Device-aware (batch_per_step, try CORE_PARALLEL across TensorCores?)."""
    try:
        kind = jax.devices()[0].device_kind.lower()
    except Exception:
        kind = ""
    if "v7" in kind or "tpu7" in kind:
        return 1, True      # 2 TCs/chip: one batch element per grid step, split across cores
    return B, False         # single-TC chips (v5e/v6e): fold the whole batch into one step


# ----- params & pure-JAX reference ------------------------------------------
def make_params(key):
    ks = jax.random.split(key, 16)
    n = lambda k, shape, s=0.05: (s * jax.random.normal(k, shape)).astype(jnp.float32)
    prm = dict(
        wp=n(ks[0], (P, D)),   bp=n(ks[1], (1, D)),
        wa=n(ks[2], (2, D)),   ba=n(ks[3], (1, D)),
        wq=n(ks[4], (6, D)),   bq=n(ks[5], (1, D)),
        ctx=n(ks[6], (1, D), 1.0),
        pos=n(ks[7], (S, D), 1.0),
        inw=n(ks[8], (L, D, 3 * D)),  inb=n(ks[9], (L, 1, 3 * D)),
        outw=n(ks[10], (L, D, D)),    outb=n(ks[11], (L, 1, D)),
        n1w=jnp.ones((L, 1, D), jnp.float32), n1b=jnp.zeros((L, 1, D), jnp.float32),
        l1w=n(ks[12], (L, D, FF)),    l1b=n(ks[13], (L, 1, FF)),
        l2w=n(ks[14], (L, FF, D)),    l2b=n(ks[15], (L, 1, D)),
        n2w=jnp.ones((L, 1, D), jnp.float32), n2b=jnp.zeros((L, 1, D), jnp.float32),
        lnw=jnp.ones((1, D), jnp.float32),    lnb=jnp.zeros((1, D), jnp.float32),
        chw=n(jax.random.fold_in(key, 99), (D, D)), chb=n(jax.random.fold_in(key, 98), (1, D)),
    )
    return prm


def reference(patches, actions, pose, p):
    pe = patches @ p["wp"] + p["bp"][0]
    ae = actions @ p["wa"] + p["ba"][0]
    qe = pose @ p["wq"] + p["bq"][0]
    ctx = jnp.broadcast_to(p["ctx"][None], (B, 1, D))
    x = jnp.concatenate([ctx, pe, ae, qe], axis=1) + p["pos"][None]
    scale = 1.0 / jnp.sqrt(jnp.float32(DH))

    def ln(x, w, b):
        mu = x.mean(-1, keepdims=True)
        xc = x - mu
        var = (xc * xc).mean(-1, keepdims=True)
        return xc * jax.lax.rsqrt(var + EPS) * w + b

    for l in range(L):
        qkv = x @ p["inw"][l] + p["inb"][l]
        q, k, v = qkv[..., :D], qkv[..., D:2 * D], qkv[..., 2 * D:]
        q = q.reshape(B, S, H, DH); k = k.reshape(B, S, H, DH); v = v.reshape(B, S, H, DH)
        s = jnp.einsum("bqhd,bkhd->bhqk", q, k) * scale
        a = jax.nn.softmax(s, axis=-1)
        o = jnp.einsum("bhqk,bkhd->bqhd", a, v).reshape(B, S, D)
        o = o @ p["outw"][l] + p["outb"][l]
        x = ln(x + o, p["n1w"][l], p["n1b"][l])
        ff = jax.nn.relu(x @ p["l1w"][l] + p["l1b"][l]) @ p["l2w"][l] + p["l2b"][l]
        x = ln(x + ff, p["n2w"][l], p["n2b"][l])
    x = ln(x, p["lnw"], p["lnb"])
    return x[:, 0] @ p["chw"] + p["chb"][0]


if __name__ == "__main__":
    key = jax.random.PRNGKey(0)
    kd, kp = jax.random.split(key)
    k1, k2, k3 = jax.random.split(kd, 3)
    patches = jax.random.normal(k1, (B, T, P), jnp.float32)
    actions = jax.random.normal(k2, (B, T, 2), jnp.float32)
    pose = jax.random.normal(k3, (B, T, 6), jnp.float32)

    prm = make_params(kp)
    wslab = pack_weights(prm)
    ref = reference(patches, actions, pose, prm)

    bb_main, want_core_parallel = pick_config()

    # Validate both batch-folding code paths regardless of chip generation.
    for bb in sorted({1, B}):
        fwd = build_forward(bb)
        out = jax.block_until_ready(fwd(patches, actions, pose, wslab))
        assert out.shape == (B, D), out.shape
        # tolerance kept at 5e-3 for the approx softmax reciprocal (EUP path)
        assert jnp.allclose(out, ref, atol=5e-3, rtol=5e-3), \
            f"bb={bb} max diff {float(jnp.max(jnp.abs(out - ref)))}"

    if want_core_parallel:
        # v7x: ask Mosaic to split the batch grid axis across the two TensorCores.
        try:
            out = jax.block_until_ready(
                build_forward(1, core_parallel=True)(patches, actions, pose, wslab))
        except Exception:
            out = None   # TODO(synk): CORE_PARALLEL unsupported on this toolchain; "parallel" path above stands.
        if out is not None:
            assert jnp.allclose(out, ref, atol=5e-3, rtol=5e-3)

    print("KERNEL_OK")
</pallas_src>

<mosaic_0001>
module attributes {stable_mosaic.version = 11 : i64} {
  func.func @kernel(%arg0: i32, %arg1: memref<1x32x32xf32, #tpu.memory_space<vmem>>, %arg2: memref<504x128xf32, #tpu.memory_space<vmem>>, %arg3: memref<1x1x32xf32, #tpu.memory_space<vmem>>) attributes {dimension_semantics = [#tpu.dimension_semantics<parallel>], iteration_bounds = array<i64: 2>, scalar_prefetch = 0 : i64, scratch_operands = 0 : i64, tpu.core_type = #tpu.core_type<tc>, window_params = [{transform_indices = @transform_0, window_bounds = array<i64: 1, 32, 32>}, {pipeline_mode = #tpu.pipeline_mode<synchronous>, transform_indices = @transform_1, window_bounds = array<i64: 504, 128>}, {transform_indices = @transform_2, window_bounds = array<i64: 1, 1, 32>}]} {
    %c64 = arith.constant 64 : index
    %c0 = arith.constant 0 : index
    %0 = vector.load %arg2[%c64, %c0] : memref<504x128xf32, #tpu.memory_space<vmem>>, vector<128x32xf32>
    %c0_0 = arith.constant 0 : index
    %c0_1 = arith.constant 0 : index
    %c0_2 = arith.constant 0 : index
    %1 = vector.load %arg1[%c0_0, %c0_1, %c0_2] : memref<1x32x32xf32, #tpu.memory_space<vmem>>, vector<1x32x32xf32>
    %2 = vector.shape_cast %1 : vector<1x32x32xf32> to vector<32x32xf32>
    %c0_3 = arith.constant 0 : index
    %c0_4 = arith.constant 0 : index
    %3 = vector.load %arg2[%c0_3, %c0_4] : memref<504x128xf32, #tpu.memory_space<vmem>>, vector<32x32xf32>
    %cst = arith.constant dense<0.000000e+00> : vector<32x32xf32>
    %4 = tpu.matmul %2, %3, %cst {dimension_numbers = #tpu.dot_dimension_numbers<[1], [0], [0], [1], [0, 0, 1, 1], [], []>} : vector<32x32xf32>, vector<32x32xf32>, vector<32x32xf32> -> vector<32x32xf32>
    %5 = vector.shape_cast %4 : vector<32x32xf32> to vector<1x32x32xf32>
    %c32 = arith.constant 32 : index
    %c0_5 = arith.constant 0 : index
    %6 = vector.load %arg2[%c32, %c0_5] : memref<504x128xf32, #tpu.memory_space<vmem>>, vector<32x32xf32>
    %7 = vector.shape_cast %6 : vector<32x32xf32> to vector<1x32x32xf32>
    %8 = arith.addf %5, %7 : vector<1x32x32xf32>
    %9 = vector.shape_cast %8 : vector<1x32x32xf32> to vector<32x32xf32>
    %c480 = arith.constant 480 : index
    %c0_6 = arith.constant 0 : index
    %10 = vector.load %arg2[%c480, %c0_6] : memref<504x128xf32, #tpu.memory_space<vmem>>, vector<8x128xf32>
    %11 = vector.extract_strided_slice %10 {offsets = [0, 0], sizes = [1, 96], strides = [1, 1]} : vector<8x128xf32> to vector<1x96xf32>
    %12 = vector.extract_strided_slice %10 {offsets = [1, 0], sizes = [1, 32], strides = [1, 1]} : vector<8x128xf32> to vector<1x32xf32>
    %13 = vector.extract_strided_slice %10 {offsets = [2, 0], sizes = [1, 32], strides = [1, 1]} : vector<8x128xf32> to vector<1x32xf32>
    %14 = vector.extract_strided_slice %10 {offsets = [3, 0], sizes = [1, 32], strides = [1, 1]} : vector<8x128xf32> to vector<1x32xf32>
    %15 = vector.extract_strided_slice %10 {offsets = [4, 0], sizes = [1, 64], strides = [1, 1]} : vector<8x128xf32> to vector<1x64xf32>
    %16 = vector.extract_strided_slice %10 {offsets = [5, 0], sizes = [1, 32], strides = [1, 1]} : vector<8x128xf32> to vector<1x32xf32>
    %17 = vector.extract_strided_slice %10 {offsets = [6, 0], sizes = [1, 32], strides = [1, 1]} : vector<8x128xf32> to vector<1x32xf32>
    %18 = vector.extract_strided_slice %10 {offsets = [7, 0], sizes = [1, 32], strides = [1, 1]} : vector<8x128xf32> to vector<1x32xf32>
    %c192 = arith.constant 192 : index
    %c0_7 = arith.constant 0 : index
    %19 = vector.load %arg2[%c192, %c0_7] : memref<504x128xf32, #tpu.memory_space<vmem>>, vector<32x96xf32>
    %cst_8 = arith.constant dense<0.000000e+00> : vector<32x96xf32>
    %20 = tpu.matmul %9, %19, %cst_8 {dimension_numbers = #tpu.dot_dimension_numbers<[1], [0], [0], [1], [0, 0, 1, 1], [], []>} : vector<32x32xf32>, vector<32x96xf32>, vector<32x96xf32> -> vector<32x96xf32>
    %21 = vector.broadcast %11 : vector<1x96xf32> to vector<32x96xf32>
    %22 = arith.addf %20, %21 : vector<32x96xf32>
    %23 = vector.extract_strided_slice %22 {offsets = [0, 0], sizes = [32, 32], strides = [1, 1]} : vector<32x96xf32> to vector<32x32xf32>
    %24 = vector.extract_strided_slice %22 {offsets = [0, 32], sizes = [32, 32], strides = [1, 1]} : vector<32x96xf32> to vector<32x32xf32>
    %25 = vector.extract_strided_slice %22 {offsets = [0, 64], sizes = [32, 32], strides = [1, 1]} : vector<32x96xf32> to vector<32x32xf32>
    %26 = vector.shape_cast %24 : vector<32x32xf32> to vector<1x32x32xf32>
    %27 = vector.shape_cast %26 : vector<1x32x32xf32> to vector<1x32x32xf32>
    %28 = vector.broadcast %27 : vector<1x32x32xf32> to vector<4x32x32xf32>
    %29 = vector.shape_cast %28 : vector<4x32x32xf32> to vector<128x32xf32>
    %30 = arith.mulf %29, %0 : vector<128x32xf32>
    %31 = vector.shape_cast %25 : vector<32x32xf32> to vector<1x32x32xf32>
    %32 = vector.shape_cast %31 : vector<1x32x32xf32> to vector<1x32x32xf32>
    %33 = vector.broadcast %32 : vector<1x32x32xf32> to vector<4x32x32xf32>
    %34 = vector.shape_cast %33 : vector<4x32x32xf32> to vector<128x32xf32>
    %35 = arith.mulf %34, %0 : vector<128x32xf32>
    %cst_9 = arith.constant dense<0.000000e+00> : vector<32x128xf32>
    %36 = tpu.matmul %23, %30, %cst_9 {dimension_numbers = #tpu.dot_dimension_numbers<[1], [1], [0], [0], [0, 0, 1, 0], [], []>} : vector<32x32xf32>, vector<128x32xf32>, vector<32x128xf32> -> vector<32x128xf32>
    %cst_10 = arith.constant dense<0xFF800000> : vector<32xf32>
    %37 = vector.multi_reduction <maximumf>, %36, %cst_10 [1] : vector<32x128xf32> to vector<32xf32>
    %38 = vector.shape_cast %37 : vector<32xf32> to vector<32x1xf32>
    %39 = vector.broadcast %38 : vector<32x1xf32> to vector<32x128xf32>
    %40 = arith.subf %36, %39 : vector<32x128xf32>
    %41 = math.exp %40 : vector<32x128xf32>
    %cst_11 = arith.constant dense<0.000000e+00> : vector<32x32xf32>
    %42 = tpu.matmul %41, %35, %cst_11 {dimension_numbers = #tpu.dot_dimension_numbers<[1], [0], [0], [1], [0, 0, 1, 1], [], []>} : vector<32x128xf32>, vector<128x32xf32>, vector<32x32xf32> -> vector<32x32xf32>
    %cst_12 = arith.constant dense<0.000000e+00> : vector<32x32xf32>
    %43 = tpu.matmul %41, %0, %cst_12 {dimension_numbers = #tpu.dot_dimension_numbers<[1], [0], [0], [1], [0, 0, 1, 1], [], []>} : vector<32x128xf32>, vector<128x32xf32>, vector<32x32xf32> -> vector<32x32xf32>
    %44 = tpu.reciprocal %43 {approx = true} : vector<32x32xf32> -> vector<32x32xf32>
    %45 = arith.mulf %42, %44 : vector<32x32xf32>
    %c224 = arith.constant 224 : index
    %c0_13 = arith.constant 0 : index
    %46 = vector.load %arg2[%c224, %c0_13] : memref<504x128xf32, #tpu.memory_space<vmem>>, vector<32x32xf32>
    %cst_14 = arith.constant dense<0.000000e+00> : vector<32x32xf32>
    %47 = tpu.matmul %45, %46, %cst_14 {dimension_numbers = #tpu.dot_dimension_numbers<[1], [0], [0], [1], [0, 0, 1, 1], [], []>} : vector<32x32xf32>, vector<32x32xf32>, vector<32x32xf32> -> vector<32x32xf32>
    %48 = vector.broadcast %12 : vector<1x32xf32> to vector<32x32xf32>
    %49 = arith.addf %47, %48 : vector<32x32xf32>
    %50 = arith.addf %9, %49 : vector<32x32xf32>
    %cst_15 = arith.constant dense<0.000000e+00> : vector<32xf32>
    %51 = vector.multi_reduction <add>, %50, %cst_15 [1] : vector<32x32xf32> to vector<32xf32>
    %52 = vector.shape_cast %51 : vector<32xf32> to vector<32x1xf32>
    %cst_16 = arith.constant 3.200000e+01 : f32
    %53 = vector.broadcast %cst_16 : f32 to vector<32x1xf32>
    %54 = arith.divf %52, %53 : vector<32x1xf32>
    %55 = vector.broadcast %54 : vector<32x1xf32> to vector<32x32xf32>
    %56 = arith.subf %50, %55 : vector<32x32xf32>
    %57 = arith.mulf %56, %56 : vector<32x32xf32>
    %cst_17 = arith.constant dense<0.000000e+00> : vector<32xf32>
    %58 = vector.multi_reduction <add>, %57, %cst_17 [1] : vector<32x32xf32> to vector<32xf32>
    %59 = vector.shape_cast %58 : vector<32xf32> to vector<32x1xf32>
    %cst_18 = arith.constant 3.200000e+01 : f32
    %60 = vector.broadcast %cst_18 : f32 to vector<32x1xf32>
    %61 = arith.divf %59, %60 : vector<32x1xf32>
    %cst_19 = arith.constant 9.99999974E-6 : f32
    %62 = vector.broadcast %cst_19 : f32 to vector<32x1xf32>
    %63 = arith.addf %61, %62 : vector<32x1xf32>
    %64 = math.rsqrt %63 : vector<32x1xf32>
    %65 = vector.broadcast %64 : vector<32x1xf32> to vector<32x32xf32>
    %66 = arith.mulf %56, %65 : vector<32x32xf32>
    %67 = vector.broadcast %13 : vector<1x32xf32> to vector<32x32xf32>
    %68 = arith.mulf %66, %67 : vector<32x32xf32>
    %69 = vector.broadcast %14 : vector<1x32xf32> to vector<32x32xf32>
    %70 = arith.addf %68, %69 : vector<32x32xf32>
    %c256 = arith.constant 256 : index
    %c0_20 = arith.constant 0 : index
    %71 = vector.load %arg2[%c256, %c0_20] : memref<504x128xf32, #tpu.memory_space<vmem>>, vector<32x64xf32>
    %cst_21 = arith.constant dense<0.000000e+00> : vector<32x64xf32>
    %72 = tpu.matmul %70, %71, %cst_21 {dimension_numbers = #tpu.dot_dimension_numbers<[1], [0], [0], [1], [0, 0, 1, 1], [], []>} : vector<32x32xf32>, vector<32x64xf32>, vector<32x64xf32> -> vector<32x64xf32>
    %73 = vector.broadcast %15 : vector<1x64xf32> to vector<32x64xf32>
    %74 = arith.addf %72, %73 : vector<32x64xf32>
    %cst_22 = arith.constant 0.000000e+00 : f32
    %75 = vector.broadcast %cst_22 : f32 to vector<32x64xf32>
    %76 = arith.maximumf %74, %75 : vector<32x64xf32>
    %c288 = arith.constant 288 : index
    %c0_23 = arith.constant 0 : index
    %77 = vector.load %arg2[%c288, %c0_23] : memref<504x128xf32, #tpu.memory_space<vmem>>, vector<32x64xf32>
    %cst_24 = arith.constant dense<0.000000e+00> : vector<32x32xf32>
    %78 = tpu.matmul %76, %77, %cst_24 {dimension_numbers = #tpu.dot_dimension_numbers<[1], [1], [0], [0], [0, 0, 1, 0], [], []>} : vector<32x64xf32>, vector<32x64xf32>, vector<32x32xf32> -> vector<32x32xf32>
    %79 = vector.broadcast %16 : vector<1x32xf32> to vector<32x32xf32>
    %80 = arith.addf %78, %79 : vector<32x32xf32>
    %81 = arith.addf %70, %80 : vector<32x32xf32>
    %cst_25 = arith.constant dense<0.000000e+00> : vector<32xf32>
    %82 = vector.multi_reduction <add>, %81, %cst_25 [1] : vector<32x32xf32> to vector<32xf32>
    %83 = vector.shape_cast %82 : vector<32xf32> to vector<32x1xf32>
    %cst_26 = arith.constant 3.200000e+01 : f32
    %84 = vector.broadcast %cst_26 : f32 to vector<32x1xf32>
    %85 = arith.divf %83, %84 : vector<32x1xf32>
    %86 = vector.broadcast %85 : vector<32x1xf32> to vector<32x32xf32>
    %87 = arith.subf %81, %86 : vector<32x32xf32>
    %88 = arith.mulf %87, %87 : vector<32x32xf32>
    %cst_27 = arith.constant dense<0.000000e+00> : vector<32xf32>
    %89 = vector.multi_reduction <add>, %88, %cst_27 [1] : vector<32x32xf32> to vector<32xf32>
    %90 = vector.shape_cast %89 : vector<32xf32> to vector<32x1xf32>
    %cst_28 = arith.constant 3.200000e+01 : f32
    %91 = vector.broadcast %cst_28 : f32 to vector<32x1xf32>
    %92 = arith.divf %90, %91 : vector<32x1xf32>
    %cst_29 = arith.constant 9.99999974E-6 : f32
    %93 = vector.broadcast %cst_29 : f32 to vector<32x1xf32>
    %94 = arith.addf %92, %93 : vector<32x1xf32>
    %95 = math.rsqrt %94 : vector<32x1xf32>
    %96 = vector.broadcast %95 : vector<32x1xf32> to vector<32x32xf32>
    %97 = arith.mulf %87, %96 : vector<32x32xf32>
    %98 = vector.broadcast %17 : vector<1x32xf32> to vector<32x32xf32>
    %99 = arith.mulf %97, %98 : vector<32x32xf32>
    %100 = vector.broadcast %18 : vector<1x32xf32> to vector<32x32xf32>
    %101 = arith.addf %99, %100 : vector<32x32xf32>
    %c488 = arith.constant 488 : index
    %c0_30 = arith.constant 0 : index
    %102 = vector.load %arg2[%c488, %c0_30] : memref<504x128xf32, #tpu.memory_space<vmem>>, vector<8x128xf32>
    %103 = vector.extract_strided_slice %102 {offsets = [0, 0], sizes = [1, 96], strides = [1, 1]} : vector<8x128xf32> to vector<1x96xf32>
    %104 = vector.extract_strided_slice %102 {offsets = [1, 0], sizes = [1, 32], strides = [1, 1]} : vector<8x128xf32> to vector<1x32xf32>
    %105 = vector.extract_strided_slice %102 {offsets = [2, 0], sizes = [1, 32], strides = [1, 1]} : vector<8x128xf32> to vector<1x32xf32>
    %106 = vector.extract_strided_slice %102 {offsets = [3, 0], sizes = [1, 32], strides = [1, 1]} : vector<8x128xf32> to vector<1x32xf32>
    %107 = vector.extract_strided_slice %102 {offsets = [4, 0], sizes = [1, 64], strides = [1, 1]} : vector<8x128xf32> to vector<1x64xf32>
    %108 = vector.extract_strided_slice %102 {offsets = [5, 0], sizes = [1, 32], strides = [1, 1]} : vector<8x128xf32> to vector<1x32xf32>
    %109 = vector.extract_strided_slice %102 {offsets = [6, 0], sizes = [1, 32], strides = [1, 1]} : vector<8x128xf32> to vector<1x32xf32>
    %110 = vector.extract_strided_slice %102 {offsets = [7, 0], sizes = [1, 32], strides = [1, 1]} : vector<8x128xf32> to vector<1x32xf32>
    %c320 = arith.constant 320 : index
    %c0_31 = arith.constant 0 : index
    %111 = vector.load %arg2[%c320, %c0_31] : memref<504x128xf32, #tpu.memory_space<vmem>>, vector<32x96xf32>
    %cst_32 = arith.constant dense<0.000000e+00> : vector<32x96xf32>
    %112 = tpu.matmul %101, %111, %cst_32 {dimension_numbers = #tpu.dot_dimension_numbers<[1], [0], [0], [1], [0, 0, 1, 1], [], []>} : vector<32x32xf32>, vector<32x96xf32>, vector<32x96xf32> -> vector<32x96xf32>
    %113 = vector.broadcast %103 : vector<1x96xf32> to vector<32x96xf32>
    %114 = arith.addf %112, %113 : vector<32x96xf32>
    %115 = vector.extract_strided_slice %114 {offsets = [0, 0], sizes = [32, 32], strides = [1, 1]} : vector<32x96xf32> to vector<32x32xf32>
    %116 = vector.extract_strided_slice %114 {offsets = [0, 32], sizes = [32, 32], strides = [1, 1]} : vector<32x96xf32> to vector<32x32xf32>
    %117 = vector.extract_strided_slice %114 {offsets = [0, 64], sizes = [32, 32], strides = [1, 1]} : vector<32x96xf32> to vector<32x32xf32>
    %118 = vector.shape_cast %116 : vector<32x32xf32> to vector<1x32x32xf32>
    %119 = vector.shape_cast %118 : vector<1x32x32xf32> to vector<1x32x32xf32>
    %120 = vector.broadcast %119 : vector<1x32x32xf32> to vector<4x32x32xf32>
    %121 = vector.shape_cast %120 : vector<4x32x32xf32> to vector<128x32xf32>
    %122 = arith.mulf %121, %0 : vector<128x32xf32>
    %123 = vector.shape_cast %117 : vector<32x32xf32> to vector<1x32x32xf32>
    %124 = vector.shape_cast %123 : vector<1x32x32xf32> to vector<1x32x32xf32>
    %125 = vector.broadcast %124 : vector<1x32x32xf32> to vector<4x32x32xf32>
    %126 = vector.shape_cast %125 : vector<4x32x32xf32> to vector<128x32xf32>
    %127 = arith.mulf %126, %0 : vector<128x32xf32>
    %cst_33 = arith.constant dense<0.000000e+00> : vector<32x128xf32>
    %128 = tpu.matmul %115, %122, %cst_33 {dimension_numbers = #tpu.dot_dimension_numbers<[1], [1], [0], [0], [0, 0, 1, 0], [], []>} : vector<32x32xf32>, vector<128x32xf32>, vector<32x128xf32> -> vector<32x128xf32>
    %cst_34 = arith.constant dense<0xFF800000> : vector<32xf32>
    %129 = vector.multi_reduction <maximumf>, %128, %cst_34 [1] : vector<32x128xf32> to vector<32xf32>
    %130 = vector.shape_cast %129 : vector<32xf32> to vector<32x1xf32>
    %131 = vector.broadcast %130 : vector<32x1xf32> to vector<32x128xf32>
    %132 = arith.subf %128, %131 : vector<32x128xf32>
    %133 = math.exp %132 : vector<32x128xf32>
    %cst_35 = arith.constant dense<0.000000e+00> : vector<32x32xf32>
    %134 = tpu.matmul %133, %127, %cst_35 {dimension_numbers = #tpu.dot_dimension_numbers<[1], [0], [0], [1], [0, 0, 1, 1], [], []>} : vector<32x128xf32>, vector<128x32xf32>, vector<32x32xf32> -> vector<32x32xf32>
    %cst_36 = arith.constant dense<0.000000e+00> : vector<32x32xf32>
    %135 = tpu.matmul %133, %0, %cst_36 {dimension_numbers = #tpu.dot_dimension_numbers<[1], [0], [0], [1], [0, 0, 1, 1], [], []>} : vector<32x128xf32>, vector<128x32xf32>, vector<32x32xf32> -> vector<32x32xf32>
    %136 = tpu.reciprocal %135 {approx = true} : vector<32x32xf32> -> vector<32x32xf32>
    %137 = arith.mulf %134, %136 : vector<32x32xf32>
    %c352 = arith.constant 352 : index
    %c0_37 = arith.constant 0 : index
    %138 = vector.load %arg2[%c352, %c0_37] : memref<504x128xf32, #tpu.memory_space<vmem>>, vector<32x32xf32>
    %cst_38 = arith.constant dense<0.000000e+00> : vector<32x32xf32>
    %139 = tpu.matmul %137, %138, %cst_38 {dimension_numbers = #tpu.dot_dimension_numbers<[1], [0], [0], [1], [0, 0, 1, 1], [], []>} : vector<32x32xf32>, vector<32x32xf32>, vector<32x32xf32> -> vector<32x32xf32>
    %140 = vector.broadcast %104 : vector<1x32xf32> to vector<32x32xf32>
    %141 = arith.addf %139, %140 : vector<32x32xf32>
    %142 = arith.addf %101, %141 : vector<32x32xf32>
    %cst_39 = arith.constant dense<0.000000e+00> : vector<32xf32>
    %143 = vector.multi_reduction <add>, %142, %cst_39 [1] : vector<32x32xf32> to vector<32xf32>
    %144 = vector.shape_cast %143 : vector<32xf32> to vector<32x1xf32>
    %cst_40 = arith.constant 3.200000e+01 : f32
    %145 = vector.broadcast %cst_40 : f32 to vector<32x1xf32>
    %146 = arith.divf %144, %145 : vector<32x1xf32>
    %147 = vector.broadcast %146 : vector<32x1xf32> to vector<32x32xf32>
    %148 = arith.subf %142, %147 : vector<32x32xf32>
    %149 = arith.mulf %148, %148 : vector<32x32xf32>
    %cst_41 = arith.constant dense<0.000000e+00> : vector<32xf32>
    %150 = vector.multi_reduction <add>, %149, %cst_41 [1] : vector<32x32xf32> to vector<32xf32>
    %151 = vector.shape_cast %150 : vector<32xf32> to vector<32x1xf32>
    %cst_42 = arith.constant 3.200000e+01 : f32
    %152 = vector.broadcast %cst_42 : f32 to vector<32x1xf32>
    %153 = arith.divf %151, %152 : vector<32x1xf32>
    %cst_43 = arith.constant 9.99999974E-6 : f32
    %154 = vector.broadcast %cst_43 : f32 to vector<32x1xf32>
    %155 = arith.addf %153, %154 : vector<32x1xf32>
    %156 = math.rsqrt %155 : vector<32x1xf32>
    %157 = vector.broadcast %156 : vector<32x1xf32> to vector<32x32xf32>
    %158 = arith.mulf %148, %157 : vector<32x32xf32>
    %159 = vector.broadcast %105 : vector<1x32xf32> to vector<32x32xf32>
    %160 = arith.mulf %158, %159 : vector<32x32xf32>
    %161 = vector.broadcast %106 : vector<1x32xf32> to vector<32x32xf32>
    %162 = arith.addf %160, %161 : vector<32x32xf32>
    %c384 = arith.constant 384 : index
    %c0_44 = arith.constant 0 : index
    %163 = vector.load %arg2[%c384, %c0_44] : memref<504x128xf32, #tpu.memory_space<vmem>>, vector<32x64xf32>
    %cst_45 = arith.constant dense<0.000000e+00> : vector<32x64xf32>
    %164 = tpu.matmul %162, %163, %cst_45 {dimension_numbers = #tpu.dot_dimension_numbers<[1], [0], [0], [1], [0, 0, 1, 1], [], []>} : vector<32x32xf32>, vector<32x64xf32>, vector<32x64xf32> -> vector<32x64xf32>
    %165 = vector.broadcast %107 : vector<1x64xf32> to vector<32x64xf32>
    %166 = arith.addf %164, %165 : vector<32x64xf32>
    %cst_46 = arith.constant 0.000000e+00 : f32
    %167 = vector.broadcast %cst_46 : f32 to vector<32x64xf32>
    %168 = arith.maximumf %166, %167 : vector<32x64xf32>
    %c416 = arith.constant 416 : index
    %c0_47 = arith.constant 0 : index
    %169 = vector.load %arg2[%c416, %c0_47] : memref<504x128xf32, #tpu.memory_space<vmem>>, vector<32x64xf32>
    %cst_48 = arith.constant dense<0.000000e+00> : vector<32x32xf32>
    %170 = tpu.matmul %168, %169, %cst_48 {dimension_numbers = #tpu.dot_dimension_numbers<[1], [1], [0], [0], [0, 0, 1, 0], [], []>} : vector<32x64xf32>, vector<32x64xf32>, vector<32x32xf32> -> vector<32x32xf32>
    %171 = vector.broadcast %108 : vector<1x32xf32> to vector<32x32xf32>
    %172 = arith.addf %170, %171 : vector<32x32xf32>
    %173 = arith.addf %162, %172 : vector<32x32xf32>
    %cst_49 = arith.constant dense<0.000000e+00> : vector<32xf32>
    %174 = vector.multi_reduction <add>, %173, %cst_49 [1] : vector<32x32xf32> to vector<32xf32>
    %175 = vector.shape_cast %174 : vector<32xf32> to vector<32x1xf32>
    %cst_50 = arith.constant 3.200000e+01 : f32
    %176 = vector.broadcast %cst_50 : f32 to vector<32x1xf32>
    %177 = arith.divf %175, %176 : vector<32x1xf32>
    %178 = vector.broadcast %177 : vector<32x1xf32> to vector<32x32xf32>
    %179 = arith.subf %173, %178 : vector<32x32xf32>
    %180 = arith.mulf %179, %179 : vector<32x32xf32>
    %cst_51 = arith.constant dense<0.000000e+00> : vector<32xf32>
    %181 = vector.multi_reduction <add>, %180, %cst_51 [1] : vector<32x32xf32> to vector<32xf32>
    %182 = vector.shape_cast %181 : vector<32xf32> to vector<32x1xf32>
    %cst_52 = arith.constant 3.200000e+01 : f32
    %183 = vector.broadcast %cst_52 : f32 to vector<32x1xf32>
    %184 = arith.divf %182, %183 : vector<32x1xf32>
    %cst_53 = arith.constant 9.99999974E-6 : f32
    %185 = vector.broadcast %cst_53 : f32 to vector<32x1xf32>
    %186 = arith.addf %184, %185 : vector<32x1xf32>
    %187 = math.rsqrt %186 : vector<32x1xf32>
    %188 = vector.broadcast %187 : vector<32x1xf32> to vector<32x32xf32>
    %189 = arith.mulf %179, %188 : vector<32x32xf32>
    %190 = vector.broadcast %109 : vector<1x32xf32> to vector<32x32xf32>
    %191 = arith.mulf %189, %190 : vector<32x32xf32>
    %192 = vector.broadcast %110 : vector<1x32xf32> to vector<32x32xf32>
    %193 = arith.addf %191, %192 : vector<32x32xf32>
    %c496 = arith.constant 496 : index
    %c0_54 = arith.constant 0 : index
    %194 = vector.load %arg2[%c496, %c0_54] : memref<504x128xf32, #tpu.memory_space<vmem>>, vector<8x128xf32>
    %195 = vector.extract_strided_slice %194 {offsets = [0, 0], sizes = [1, 32], strides = [1, 1]} : vector<8x128xf32> to vector<1x32xf32>
    %196 = vector.extract_strided_slice %194 {offsets = [1, 0], sizes = [1, 32], strides = [1, 1]} : vector<8x128xf32> to vector<1x32xf32>
    %cst_55 = arith.constant dense<0.000000e+00> : vector<32xf32>
    %197 = vector.multi_reduction <add>, %193, %cst_55 [1] : vector<32x32xf32> to vector<32xf32>
    %198 = vector.shape_cast %197 : vector<32xf32> to vector<32x1xf32>
    %cst_56 = arith.constant 3.200000e+01 : f32
    %199 = vector.broadcast %cst_56 : f32 to vector<32x1xf32>
    %200 = arith.divf %198, %199 : vector<32x1xf32>
    %201 = vector.broadcast %200 : vector<32x1xf32> to vector<32x32xf32>
    %202 = arith.subf %193, %201 : vector<32x32xf32>
    %203 = arith.mulf %202, %202 : vector<32x32xf32>
    %cst_57 = arith.constant dense<0.000000e+00> : vector<32xf32>
    %204 = vector.multi_reduction <add>, %203, %cst_57 [1] : vector<32x32xf32> to vector<32xf32>
    %205 = vector.shape_cast %204 : vector<32xf32> to vector<32x1xf32>
    %cst_58 = arith.constant 3.200000e+01 : f32
    %206 = vector.broadcast %cst_58 : f32 to vector<32x1xf32>
    %207 = arith.divf %205, %206 : vector<32x1xf32>
    %cst_59 = arith.constant 9.99999974E-6 : f32
    %208 = vector.broadcast %cst_59 : f32 to vector<32x1xf32>
    %209 = arith.addf %207, %208 : vector<32x1xf32>
    %210 = math.rsqrt %209 : vector<32x1xf32>
    %211 = vector.broadcast %210 : vector<32x1xf32> to vector<32x32xf32>
    %212 = arith.mulf %202, %211 : vector<32x32xf32>
    %213 = vector.broadcast %195 : vector<1x32xf32> to vector<32x32xf32>
    %214 = arith.mulf %212, %213 : vector<32x32xf32>
    %215 = vector.broadcast %196 : vector<1x32xf32> to vector<32x32xf32>
    %216 = arith.addf %214, %215 : vector<32x32xf32>
    %217 = vector.shape_cast %216 : vector<32x32xf32> to vector<1x32x32xf32>
    %218 = vector.extract_strided_slice %217 {offsets = [0, 0, 0], sizes = [1, 1, 32], strides = [1, 1, 1]} : vector<1x32x32xf32> to vector<1x1x32xf32>
    %219 = vector.shape_cast %218 : vector<1x1x32xf32> to vector<1x32xf32>
    %c448 = arith.constant 448 : index
    %c0_60 = arith.constant 0 : index
    %220 = vector.load %arg2[%c448, %c0_60] : memref<504x128xf32, #tpu.memory_space<vmem>>, vector<32x32xf32>
    %cst_61 = arith.constant dense<0.000000e+00> : vector<1x32xf32>
    %221 = tpu.matmul %219, %220, %cst_61 {dimension_numbers = #tpu.dot_dimension_numbers<[1], [0], [0], [1], [0, 0, 1, 1], [], []>} : vector<1x32xf32>, vector<32x32xf32>, vector<1x32xf32> -> vector<1x32xf32>
    %222 = vector.extract_strided_slice %194 {offsets = [2, 0], sizes = [1, 32], strides = [1, 1]} : vector<8x128xf32> to vector<1x32xf32>
    %223 = arith.addf %221, %222 : vector<1x32xf32>
    %224 = vector.shape_cast %223 : vector<1x32xf32> to vector<1x1x32xf32>
    %c0_62 = arith.constant 0 : index
    %c0_63 = arith.constant 0 : index
    %c0_64 = arith.constant 0 : index
    %225 = vector.load %arg3[%c0_62, %c0_63, %c0_64] : memref<1x1x32xf32, #tpu.memory_space<vmem>>, vector<1x1x32xf32>
    tpu.vector_store %arg3[%c0_62, %c0_63, %c0_64], %224 {strides = array<i32>} : memref<1x1x32xf32, #tpu.memory_space<vmem>>, vector<1x1x32xf32>,
    return
  }
  func.func @transform_0(%arg0: i32) -> (i32, i32, i32) {
    %c0_i32 = arith.constant 0 : i32
    %c0_i32_0 = arith.constant 0 : i32
    %c0_i32_1 = arith.constant 0 : i32
    return %arg0, %c0_i32, %c0_i32_0 : i32, i32, i32
  }
  func.func @transform_1(%arg0: i32) -> (i32, i32) {
    %c0_i32 = arith.constant 0 : i32
    %c0_i32_0 = arith.constant 0 : i32
    %c0_i32_1 = arith.constant 0 : i32
    return %c0_i32, %c0_i32_0 : i32, i32
  }
  func.func @transform_2(%arg0: i32) -> (i32, i32, i32) {
    %c0_i32 = arith.constant 0 : i32
    %c0_i32_0 = arith.constant 0 : i32
    %c0_i32_1 = arith.constant 0 : i32
    return %arg0, %c0_i32, %c0_i32_0 : i32, i32, i32
  }
}

</mosaic_0001>

<llo_original>
// kernel: forward.1
$region0: #{forward.1}
  #allocation0 [shape = 'u32[]', space=smem, size = 0x4, offset = 0x4, fixed_abs, tag = 'smem constant byte address 0x4 - core index']
  #allocation1 [shape = 'u32[144,128]{1,0:T(1,128)}', space=vmem, size = 0x12000, scoped, tag = 'internal scratch']
  %s0 = inlined_call_operand.vmem [shape: f32[2,32,32], index: 0, kind: input, shape index: {}]
  %s1 = inlined_call_operand.hbm [shape: f32[504,128], index: 1, kind: input, shape index: {}]
  %s2 = inlined_call_operand.hbm [shape: f32[2,1,32], index: 2, kind: output, shape index: {}]
  %s3 = sld [smem:[#allocation0]]
  $region45: #{forward.1} parent=0
    _
  %s5 = ssub.s32 1, %s3
  %s6 = scalar_select 0, %s5, %s3
  $region1: #{forward.1} parent=0
    #allocation2 [shape = 'u8[258048]{0}', space=vmem, size = 0x3f000, scoped, tag = 'input window, operand 1, single buffered']
    #allocation3 [shape = 's32[2]{0}', space=sflag, size = 0x8, scoped, tag = 'scoped memory for forward.1']
    #allocation4 [shape = 's32[2]{0}', space=sflag, size = 0x8, scoped, tag = 'scoped memory for forward.1']
    #allocation5 [shape = 'u8[1024]{0}', space=vmem, size = 0x400, scoped, tag = 'output window, operand 0']
    %7 = vsyncpa [#allocation3], 0
    %8 = vsyncpa [#allocation4], 0
    %s9 = scalar_lea.sflag [#allocation4], 1
    %10 = vsyncpa %s9, 0
    loop: start=0, step=1, limit=4
    $region2: #{forward.1} parent=1 // loop_pre_header
      _
    $region3: #{forward.1} parent=1 // loop_header
      %s12 = sphi 0, %s16
      %p13 = scmp.ge.s32.totalorder %s12, 4
      %s22 = sphi 0, %s24
      %s25 = sphi 0, %s22
      %s26 = sphi 0, %s25
      %s42 = sphi 0, %s26
      %s46 = sphi 0, %s46
      %s48 = sphi 0, %s46
      %s49 = sphi 0, %s48
      %s63 = sphi 0, %s49
      %s69 = sphi 0, %s71
      %s72 = sphi 0, %s69
      %s73 = sphi 0, %s72
      %s89 = sphi 0, %s73
    $region4: #{forward.1} parent=1 // loop_header_branch
      %15 = sbr.rel (%p13) target = $region8
    $region5: #{forward.1} parent=1 // loop_body
      %s17 = ssub.s32 %s12, 1
      %s18 = ssub.s32 %s12, 2
      %s19 = sadd.s32 %s12, 1
      %s20 = ssub.s32 %s12, %s19
      %p21 = scmp.eq.s32.totalorder %s20, 0
      %s23 = sadd.s32 %s22, 1
      %s24 = scalar_select %p21, %s22, %s23
      %p27 = pneg %p21
      %p28 = scmp.eq.s32.totalorder %s12, 1
      %p29 = por %p27, %p28
      %p30 = scmp.ne.s32.totalorder %s22, %s25
      %p31 = scmp.eq.s32.totalorder %s12, 0
      %p32 = por %p30, %p31
      %p33 = scmp.ne.s32.totalorder %s22, %s25
      %p34 = scmp.eq.s32.totalorder %s17, 1
      %p35 = por %p33, %p34
      %p36 = scmp.ne.s32.totalorder %s25, %s26
      %p37 = scmp.eq.s32.totalorder %s17, 0
      %p38 = por %p36, %p37
      %p39 = scmp.ne.s32.totalorder %s25, %s26
      %p40 = scmp.eq.s32.totalorder %s18, 1
      %p41 = por %p39, %p40
      %p43 = scmp.ne.s32.totalorder %s26, %s42
      %p44 = scmp.eq.s32.totalorder %s18, 0
      %p45 = por %p43, %p44
      %s47 = sadd.s32 %s46, 1
      %p50 = scmp.eq.s32.totalorder %s12, 1
      %p51 = scmp.ne.s32.totalorder %s46, %s48
      %p52 = scmp.eq.s32.totalorder %s12, 0
      %p53 = por %p51, %p52
      %p54 = scmp.ne.s32.totalorder %s46, %s48
      %p55 = scmp.eq.s32.totalorder %s17, 1
      %p56 = por %p54, %p55
      %p57 = scmp.ne.s32.totalorder %s48, %s49
      %p58 = scmp.eq.s32.totalorder %s17, 0
      %p59 = por %p57, %p58
      %p60 = scmp.ne.s32.totalorder %s48, %s49
      %p61 = scmp.eq.s32.totalorder %s18, 1
      %p62 = por %p60, %p61
      %p64 = scmp.ne.s32.totalorder %s49, %s63
      %p65 = scmp.eq.s32.totalorder %s18, 0
      %p66 = por %p64, %p65
      %s67 = ssub.s32 %s12, %s19
      %p68 = scmp.eq.s32.totalorder %s67, 0
      %s70 = sadd.s32 %s69, 1
      %s71 = scalar_select %p68, %s69, %s70
      %p74 = pneg %p68
      %p75 = scmp.eq.s32.totalorder %s12, 1
      %p76 = por %p74, %p75
      %p77 = scmp.ne.s32.totalorder %s69, %s72
      %p78 = scmp.eq.s32.totalorder %s12, 0
      %p79 = por %p77, %p78
      %p80 = scmp.ne.s32.totalorder %s69, %s72
      %p81 = scmp.eq.s32.totalorder %s17, 1
      %p82 = por %p80, %p81
      %p83 = scmp.ne.s32.totalorder %s72, %s73
      %p84 = scmp.eq.s32.totalorder %s17, 0
      %p85 = por %p83, %p84
      %p86 = scmp.ne.s32.totalorder %s72, %s73
      %p87 = scmp.eq.s32.totalorder %s18, 1
      %p88 = por %p86, %p87
      %p90 = scmp.ne.s32.totalorder %s73, %s89
      %p91 = scmp.eq.s32.totalorder %s18, 0
      %p92 = por %p90, %p91
      %p93 = scmp.le.s32.totalorder 1, %s12
      %p94 = scmp.lt.s32.totalorder %s12, 3
      %p95 = pnand %p93, %p94
      %p96 = pneg %p95
      // Predicated region
      $region9: #{forward.1} parent=5 // pred_check
        _
      $region10: #{forward.1} parent=5 // pred_check_branch
        %98 = sbr.rel (%p95) target = $region12
      $region11: #{forward.1} parent=5 // pred_region
        %s99 = ssub.s32 %s12, 1
        // Predicated region
        $region13: #{forward.1} parent=11 // pred_check
          %p100 = pneg %p59
        $region14: #{forward.1} parent=11 // pred_check_branch
          %102 = sbr.rel (%p100) target = $region16
        $region15: #{forward.1} parent=11 // pred_region
          %s104 = ssub.s32 8064, 8064
          %105 = vsyncadd [#allocation3], %s104
          %s106 = sshll.u32 [#allocation2], 4
          %s107 = int_to_ptr.vmem [resolvable:$true] %s106
          %112 = dma.hbm_to_vmem [thread:$0]  %s1, 8064, %s107, [#allocation3], 128, 128, 8
        $region16: #{forward.1} parent=11 // pred_fallthru
          _
      $region12: #{forward.1} parent=5 // pred_fallthru
        _
      %p113 = scmp.lt.s32.totalorder %s12, 2
      // Predicated region
      $region17: #{forward.1} parent=5 // pred_check
        %p114 = pneg %p113
      $region18: #{forward.1} parent=5 // pred_check_branch
        %116 = sbr.rel (%p114) target = $region20
      $region19: #{forward.1} parent=5 // pred_region
        // Predicated region
        $region21: #{forward.1} parent=19 // pred_check
          %p117 = pneg %p32
        $region22: #{forward.1} parent=19 // pred_check_branch
          %119 = sbr.rel (%p117) target = $region24
        $region23: #{forward.1} parent=19 // pred_region
          %p120 = scmp.lt.s32.totalorder %s12, 1
          %s121 = scalar_select %p120, %s12, 1
          %s122 = smul.addr %s121, 4
          %s123 = smul.addr %s122, 8
          %s124 = scalar_lea.vmem %s0, %s123
        $region24: #{forward.1} parent=19 // pred_fallthru
          _
      $region20: #{forward.1} parent=5 // pred_fallthru
        _
      %p125 = scmp.le.s32.totalorder 1, %s12
      %p126 = scmp.lt.s32.totalorder %s12, 3
      %p127 = pnand %p125, %p126
      %p128 = pneg %p127
      // Predicated region
      $region25: #{forward.1} parent=5 // pred_check
        _
      $region26: #{forward.1} parent=5 // pred_check_branch
        %130 = sbr.rel (%p127) target = $region28
      $region27: #{forward.1} parent=5 // pred_region
        %s131 = ssub.s32 %s12, 1
        // Predicated region
        $region29: #{forward.1} parent=27 // pred_check
          %p132 = pneg %p59
        $region30: #{forward.1} parent=27 // pred_check_branch
          %134 = sbr.rel (%p132) target = $region32
        $region31: #{forward.1} parent=27 // pred_region
          %135 = dma.done [#allocation3], 8064
        $region32: #{forward.1} parent=27 // pred_fallthru
          _
        %p136 = scmp.lt.s32.totalorder %s17, 1
        %s137 = scalar_select %p136, %s17, 1
        %s138 = smul.addr %s137, 4
        %s139 = smul.addr %s138, 8
        %s140 = scalar_lea.vmem %s0, %s139
        %p141 = pneg %p38
        %p142 = pneg %p35
        %p143 = pneg %p59
        %p144 = pneg %p56
        %p145 = pneg %p85
        %p146 = pneg %p82
        %s147 = sand.u32 %s72, 1
        %s148 = scalar_lea.sflag [#allocation4], %s147
        %s149 = sand.u32 %s72, 1
        %s150 = scalar_lea.vmem [#allocation5], %s149
        %p151 = scmp.lt.s32.totalorder %s17, 1
        %s152 = scalar_select %p151, %s17, 1
        %s153 = smul.addr %s152, 4
        %s154 = smul.addr %s153, 8
        %s155 = scalar_lea.vmem %s0, %s154
        %v156 = vld [vmem:[#allocation2 + $0x40] sm:$0xff]
        %v157 = vld [vmem:[#allocation2 + $0x48] sm:$0xff]
        %v158 = vld [vmem:[#allocation2 + $0x50] sm:$0xff]
        %v159 = vld [vmem:[#allocation2 + $0x58] sm:$0xff]
        %v160 = vld [vmem:[#allocation2 + $0x60] sm:$0xff]
        %v161 = vld [vmem:[#allocation2 + $0x68] sm:$0xff]
        %v162 = vld [vmem:[#allocation2 + $0x70] sm:$0xff]
        %v163 = vld [vmem:[#allocation2 + $0x78] sm:$0xff]
        %v164 = vld [vmem:[#allocation2 + $0x80] sm:$0xff]
        %v165 = vld [vmem:[#allocation2 + $0x88] sm:$0xff]
        %v166 = vld [vmem:[#allocation2 + $0x90] sm:$0xff]
        %v167 = vld [vmem:[#allocation2 + $0x98] sm:$0xff]
        %v168 = vld [vmem:[#allocation2 + $0xa0] sm:$0xff]
        %v169 = vld [vmem:[#allocation2 + $0xa8] sm:$0xff]
        %v170 = vld [vmem:[#allocation2 + $0xb0] sm:$0xff]
        %v171 = vld [vmem:[#allocation2 + $0xb8] sm:$0xff]
        %v172 = vld [vmem:[%s155] sm:$0xff]
        %v173 = vld [vmem:[%s155 + $0x8] sm:$0xff]
        %v174 = vld [vmem:[%s155 + $0x10] sm:$0xff]
        %v175 = vld [vmem:[%s155 + $0x18] sm:$0xff]
        %v176 = vld [vmem:[#allocation2] sm:$0xff]
        %v177 = vld [vmem:[#allocation2 + $0x8] sm:$0xff]
        %v178 = vld [vmem:[#allocation2 + $0x10] sm:$0xff]
        %v179 = vld [vmem:[#allocation2 + $0x18] sm:$0xff]
        %vm180 = vcmask 261120
        %v182 = vsel %vm180, %v172, 0
        %v185 = vsel %vm180, %v173, 0
        %v188 = vsel %vm180, %v174, 0
        %v191 = vsel %vm180, %v175, 0
        %193 = vmatprep.subr.mxu0 0.0
        %194 = vmatpush1.msra.mxu0 0.0
        %195 = vmatprep.subr.mxu0 0.0
        %196 = vmatpush1.msra.mxu0 0.0
        %197 = vmatprep.subr.mxu0 0.0
        %198 = vmatpush1.msra.mxu0 0.0
        %199 = vmatprep.subr.mxu0 0.0
        %200 = vmatpush1.msra.mxu0 0.0
        %201 = vmatprep.subr.mxu0 0.0
        %202 = vmatpush1.msra.mxu0 0.0
        %203 = vmatprep.subr.mxu0 0.0
        %204 = vmatpush1.msra.mxu0 0.0
        %205 = vmatprep.subr.mxu0 0.0
        %206 = vmatpush1.msra.mxu0 0.0
        %207 = vmatprep.subr.mxu0 0.0
        %208 = vmatpush1.msra.mxu0 0.0
        %209 = vmatprep.subr.mxu0 0.0
        %210 = vmatpush1.msra.mxu0 0.0
        %211 = vmatprep.subr.mxu0 0.0
        %212 = vmatpush1.msra.mxu0 0.0
        %213 = vmatprep.subr.mxu0 0.0
        %214 = vmatpush1.msra.mxu0 0.0
        %215 = vmatprep.subr.mxu0 0.0
        %216 = vmatpush1.msra.mxu0 0.0
        %217 = vmatprep.subr.mxu0 0.0
        %218 = vmatpush1.msra.mxu0 %v179
        %219 = vmatprep.subr.mxu0 0.0
        %220 = vmatpush1.msra.mxu0 %v178
        %221 = vmatprep.subr.mxu0 0.0
        %222 = vmatpush1.msra.mxu0 %v177
        %223 = vmatprep.subr.mxu0 0.0
        %224 = vmatpush1.msra.mxu0 %v176
        %225 = vmatprep.subr.mxu0 0.0
        %226 = vmatpush2.msra.mxu0 0.0
        %227 = vmatprep.subr.mxu0 0.0
        %228 = vmatpush2.msra.mxu0 0.0
        %229 = vmatprep.subr.mxu0 0.0
        %230 = vmatpush2.msra.mxu0 0.0
        %231 = vmatprep.subr.mxu0 0.0
        %232 = vmatpush2.msra.mxu0 0.0
        %233 = vmatprep.subr.mxu0 0.0
        %234 = vmatpush2.msra.mxu0 0.0
        %235 = vmatprep.subr.mxu0 0.0
        %236 = vmatpush2.msra.mxu0 0.0
        %237 = vmatprep.subr.mxu0 0.0
        %238 = vmatpush2.msra.mxu0 0.0
        %239 = vmatprep.subr.mxu0 0.0
        %240 = vmatpush2.msra.mxu0 0.0
        %241 = vmatprep.subr.mxu0 0.0
        %242 = vmatpush2.msra.mxu0 0.0
        %243 = vmatprep.subr.mxu0 0.0
        %244 = vmatpush2.msra.mxu0 0.0
        %245 = vmatprep.subr.mxu0 0.0
        %246 = vmatpush2.msra.mxu0 0.0
        %247 = vmatprep.subr.mxu0 0.0
        %248 = vmatpush2.msra.mxu0 0.0
        %249 = vmatprep.subr.mxu0 0.0
        %250 = vmatpush2.msra.mxu0 0.0
        %251 = vmatprep.subr.mxu0 0.0
        %252 = vmatpush2.msra.mxu0 0.0
        %253 = vmatprep.subr.mxu0 0.0
        %254 = vmatpush2.msra.mxu0 0.0
        %255 = vmatprep.subr.mxu0 0.0
        %256 = vmatpush2.msra.mxu0 0.0
        %257 = vmatprep.mubr.f32.mxu0 0.0
        %258 = vmatmul.mubr.f32.gmra.mxu0 %v182
        %v259 = vpop.f32.mrf.mxu0
        %v260 = vadd.f32 0.0, %v259
        %v261 = vpop.f32.mrf.mxu0
        %262 = vmatprep.mubr.f32.mxu0 0.0
        %263 = vmatmul.mubr.f32.gmra.mxu0 %v185
        %v264 = vpop.f32.mrf.mxu0
        %v265 = vadd.f32 0.0, %v264
        %v266 = vpop.f32.mrf.mxu0
        %267 = vmatprep.mubr.f32.mxu0 0.0
        %268 = vmatmul.mubr.f32.gmra.mxu0 %v188
        %v269 = vpop.f32.mrf.mxu0
        %v270 = vadd.f32 0.0, %v269
        %v271 = vpop.f32.mrf.mxu0
        %272 = vmatprep.mubr.f32.mxu0 0.0
        %273 = vmatmul.mubr.f32.gmra.mxu0 %v191
        %v274 = vpop.f32.mrf.mxu0
        %v275 = vadd.f32 0.0, %v274
        %v276 = vpop.f32.mrf.mxu0
        %277 = vdwg.mxu0
        %v278 = vld [vmem:[#allocation2 + $0x20] sm:$0xff]
        %v279 = vld [vmem:[#allocation2 + $0x28] sm:$0xff]
        %v280 = vld [vmem:[#allocation2 + $0x30] sm:$0xff]
        %v281 = vld [vmem:[#allocation2 + $0x38] sm:$0xff]
        %v282 = vadd.f32 %v260, %v278
        %v283 = vadd.f32 %v265, %v279
        %v284 = vadd.f32 %v270, %v280
        %v285 = vadd.f32 %v275, %v281
        %v286 = vld [vmem:[#allocation2 + $0x1e0] sm:$0xff]
        %v287 = vld [vmem:[#allocation2 + $0xc0] sm:$0xff]
        %v288 = vld [vmem:[#allocation2 + $0xc8] sm:$0xff]
        %v289 = vld [vmem:[#allocation2 + $0xd0] sm:$0xff]
        %v290 = vld [vmem:[#allocation2 + $0xd8] sm:$0xff]
        %v291 = vlaneseq
        %v292 = vshrl.u32 %v291, 7
        %v293 = vsub.s32 0, %v292
        %v294 = vrot.slane %v286, %v293
        %v296 = vsel %vm180, %v282, 0
        %v299 = vsel %vm180, %v283, 0
        %v302 = vsel %vm180, %v284, 0
        %v305 = vsel %vm180, %v285, 0
        %307 = vmatprep.subr.mxu0 0.0
        %308 = vmatpush1.msra.mxu0 0.0
        %309 = vmatprep.subr.mxu0 0.0
        %310 = vmatpush1.msra.mxu0 0.0
        %311 = vmatprep.subr.mxu0 0.0
        %312 = vmatpush1.msra.mxu0 0.0
        %313 = vmatprep.subr.mxu0 0.0
        %314 = vmatpush1.msra.mxu0 0.0
        %315 = vmatprep.subr.mxu0 0.0
        %316 = vmatpush1.msra.mxu0 0.0
        %317 = vmatprep.subr.mxu0 0.0
        %318 = vmatpush1.msra.mxu0 0.0
        %319 = vmatprep.subr.mxu0 0.0
        %320 = vmatpush1.msra.mxu0 0.0
        %321 = vmatprep.subr.mxu0 0.0
        %322 = vmatpush1.msra.mxu0 0.0
        %323 = vmatprep.subr.mxu0 0.0
        %324 = vmatpush1.msra.mxu0 0.0
        %325 = vmatprep.subr.mxu0 0.0
        %326 = vmatpush1.msra.mxu0 0.0
        %327 = vmatprep.subr.mxu0 0.0
        %328 = vmatpush1.msra.mxu0 0.0
        %329 = vmatprep.subr.mxu0 0.0
        %330 = vmatpush1.msra.mxu0 0.0
        %331 = vmatprep.subr.mxu0 0.0
        %332 = vmatpush1.msra.mxu0 %v290
        %333 = vmatprep.subr.mxu0 0.0
        %334 = vmatpush1.msra.mxu0 %v289
        %335 = vmatprep.subr.mxu0 0.0
        %336 = vmatpush1.msra.mxu0 %v288
        %337 = vmatprep.subr.mxu0 0.0
        %338 = vmatpush1.msra.mxu0 %v287
        %339 = vmatprep.subr.mxu0 0.0
        %340 = vmatpush2.msra.mxu0 0.0
        %341 = vmatprep.subr.mxu0 0.0
        %342 = vmatpush2.msra.mxu0 0.0
        %343 = vmatprep.subr.mxu0 0.0
        %344 = vmatpush2.msra.mxu0 0.0
        %345 = vmatprep.subr.mxu0 0.0
        %346 = vmatpush2.msra.mxu0 0.0
        %347 = vmatprep.subr.mxu0 0.0
        %348 = vmatpush2.msra.mxu0 0.0
        %349 = vmatprep.subr.mxu0 0.0
        %350 = vmatpush2.msra.mxu0 0.0
        %351 = vmatprep.subr.mxu0 0.0
        %352 = vmatpush2.msra.mxu0 0.0
        %353 = vmatprep.subr.mxu0 0.0
        %354 = vmatpush2.msra.mxu0 0.0
        %355 = vmatprep.subr.mxu0 0.0
        %356 = vmatpush2.msra.mxu0 0.0
        %357 = vmatprep.subr.mxu0 0.0
        %358 = vmatpush2.msra.mxu0 0.0
        %359 = vmatprep.subr.mxu0 0.0
        %360 = vmatpush2.msra.mxu0 0.0
        %361 = vmatprep.subr.mxu0 0.0
        %362 = vmatpush2.msra.mxu0 0.0
        %363 = vmatprep.subr.mxu0 0.0
        %364 = vmatpush2.msra.mxu0 0.0
        %365 = vmatprep.subr.mxu0 0.0
        %366 = vmatpush2.msra.mxu0 0.0
        %367 = vmatprep.subr.mxu0 0.0
        %368 = vmatpush2.msra.mxu0 0.0
        %369 = vmatprep.subr.mxu0 0.0
        %370 = vmatpush2.msra.mxu0 0.0
        %371 = vmatprep.mubr.f32.mxu0 0.0
        %372 = vmatmul.mubr.f32.gmra.mxu0 %v296
        %v373 = vpop.f32.mrf.mxu0
        %v374 = vadd.f32 %v294, %v373
        %v375 = vpop.f32.mrf.mxu0
        %376 = vmatprep.mubr.f32.mxu0 0.0
        %377 = vmatmul.mubr.f32.gmra.mxu0 %v299
        %v378 = vpop.f32.mrf.mxu0
        %v379 = vadd.f32 %v294, %v378
        %v380 = vpop.f32.mrf.mxu0
        %381 = vmatprep.mubr.f32.mxu0 0.0
        %382 = vmatmul.mubr.f32.gmra.mxu0 %v302
        %v383 = vpop.f32.mrf.mxu0
        %v384 = vadd.f32 %v294, %v383
        %v385 = vpop.f32.mrf.mxu0
        %386 = vmatprep.mubr.f32.mxu0 0.0
        %387 = vmatmul.mubr.f32.gmra.mxu0 %v305
        %v388 = vpop.f32.mrf.mxu0
        %v389 = vadd.f32 %v294, %v388
        %v390 = vpop.f32.mrf.mxu0
        %391 = vdwg.mxu0
        %408 = vrot.lane.b32.xlu0 %v156, 32
        %v409 = vpop.permute.xlu0 %408
        %410 = vrot.lane.b32.xlu0 %v157, 32
        %v411 = vpop.permute.xlu0 %410
        %412 = vrot.lane.b32.xlu0 %v158, 32
        %v413 = vpop.permute.xlu0 %412
        %414 = vrot.lane.b32.xlu0 %v159, 32
        %v415 = vpop.permute.xlu0 %414
        %416 = vrot.lane.b32.xlu0 %v160, 32
        %v417 = vpop.permute.xlu0 %416
        %418 = vrot.lane.b32.xlu0 %v161, 32
        %v419 = vpop.permute.xlu0 %418
        %420 = vrot.lane.b32.xlu0 %v162, 32
        %v421 = vpop.permute.xlu0 %420
        %422 = vrot.lane.b32.xlu0 %v163, 32
        %v423 = vpop.permute.xlu0 %422
        %424 = vrot.lane.b32.xlu0 %v164, 32
        %v425 = vpop.permute.xlu0 %424
        %426 = vrot.lane.b32.xlu0 %v165, 32
        %v427 = vpop.permute.xlu0 %426
        %428 = vrot.lane.b32.xlu0 %v166, 32
        %v429 = vpop.permute.xlu0 %428
        %430 = vrot.lane.b32.xlu0 %v167, 32
        %v431 = vpop.permute.xlu0 %430
        %432 = vrot.lane.b32.xlu0 %v168, 32
        %v433 = vpop.permute.xlu0 %432
        %434 = vrot.lane.b32.xlu0 %v169, 32
        %v435 = vpop.permute.xlu0 %434
        %436 = vrot.lane.b32.xlu0 %v170, 32
        %v437 = vpop.permute.xlu0 %436
        %438 = vrot.lane.b32.xlu0 %v171, 32
        %v439 = vpop.permute.xlu0 %438
        %v456 = vmul.f32 %v374, %v409
        %v457 = vmul.f32 %v379, %v411
        %v458 = vmul.f32 %v384, %v413
        %v459 = vmul.f32 %v389, %v415
        %v460 = vmul.f32 %v374, %v417
        %v461 = vmul.f32 %v379, %v419
        %v462 = vmul.f32 %v384, %v421
        %v463 = vmul.f32 %v389, %v423
        %v464 = vmul.f32 %v374, %v425
        %v465 = vmul.f32 %v379, %v427
        %v466 = vmul.f32 %v384, %v429
        %v467 = vmul.f32 %v389, %v431
        %v468 = vmul.f32 %v374, %v433
        %v469 = vmul.f32 %v379, %v435
        %v470 = vmul.f32 %v384, %v437
        %v471 = vmul.f32 %v389, %v439
        %472 = vrot.lane.b32.xlu0 %v156, 64
        %v473 = vpop.permute.xlu0 %472
        %474 = vrot.lane.b32.xlu0 %v157, 64
        %v475 = vpop.permute.xlu0 %474
        %476 = vrot.lane.b32.xlu0 %v158, 64
        %v477 = vpop.permute.xlu0 %476
        %478 = vrot.lane.b32.xlu0 %v159, 64
        %v479 = vpop.permute.xlu0 %478
        %480 = vrot.lane.b32.xlu0 %v160, 64
        %v481 = vpop.permute.xlu0 %480
        %482 = vrot.lane.b32.xlu0 %v161, 64
        %v483 = vpop.permute.xlu0 %482
        %484 = vrot.lane.b32.xlu0 %v162, 64
        %v485 = vpop.permute.xlu0 %484
        %486 = vrot.lane.b32.xlu0 %v163, 64
        %v487 = vpop.permute.xlu0 %486
        %488 = vrot.lane.b32.xlu0 %v164, 64
        %v489 = vpop.permute.xlu0 %488
        %490 = vrot.lane.b32.xlu0 %v165, 64
        %v491 = vpop.permute.xlu0 %490
        %492 = vrot.lane.b32.xlu0 %v166, 64
        %v493 = vpop.permute.xlu0 %492
        %494 = vrot.lane.b32.xlu0 %v167, 64
        %v495 = vpop.permute.xlu0 %494
        %496 = vrot.lane.b32.xlu0 %v168, 64
        %v497 = vpop.permute.xlu0 %496
        %498 = vrot.lane.b32.xlu0 %v169, 64
        %v499 = vpop.permute.xlu0 %498
        %500 = vrot.lane.b32.xlu0 %v170, 64
        %v501 = vpop.permute.xlu0 %500
        %502 = vrot.lane.b32.xlu0 %v171, 64
        %v503 = vpop.permute.xlu0 %502
        %v520 = vmul.f32 %v374, %v473
        %v521 = vmul.f32 %v379, %v475
        %v522 = vmul.f32 %v384, %v477
        %v523 = vmul.f32 %v389, %v479
        %v524 = vmul.f32 %v374, %v481
        %v525 = vmul.f32 %v379, %v483
        %v526 = vmul.f32 %v384, %v485
        %v527 = vmul.f32 %v389, %v487
        %v528 = vmul.f32 %v374, %v489
        %v529 = vmul.f32 %v379, %v491
        %v530 = vmul.f32 %v384, %v493
        %v531 = vmul.f32 %v389, %v495
        %v532 = vmul.f32 %v374, %v497
        %v533 = vmul.f32 %v379, %v499
        %v534 = vmul.f32 %v384, %v501
        %v535 = vmul.f32 %v389, %v503
        %552 = vrot.lane.b32.xlu0 %v456, 96
        %v553 = vpop.permute.xlu0 %552
        %554 = vrot.lane.b32.xlu0 %v457, 96
        %v555 = vpop.permute.xlu0 %554
        %556 = vrot.lane.b32.xlu0 %v458, 96
        %v557 = vpop.permute.xlu0 %556
        %558 = vrot.lane.b32.xlu0 %v459, 96
        %v559 = vpop.permute.xlu0 %558
        %560 = vrot.lane.b32.xlu0 %v460, 96
        %v561 = vpop.permute.xlu0 %560
        %562 = vrot.lane.b32.xlu0 %v461, 96
        %v563 = vpop.permute.xlu0 %562
        %564 = vrot.lane.b32.xlu0 %v462, 96
        %v565 = vpop.permute.xlu0 %564
        %566 = vrot.lane.b32.xlu0 %v463, 96
        %v567 = vpop.permute.xlu0 %566
        %568 = vrot.lane.b32.xlu0 %v464, 96
        %v569 = vpop.permute.xlu0 %568
        %570 = vrot.lane.b32.xlu0 %v465, 96
        %v571 = vpop.permute.xlu0 %570
        %572 = vrot.lane.b32.xlu0 %v466, 96
        %v573 = vpop.permute.xlu0 %572
        %574 = vrot.lane.b32.xlu0 %v467, 96
        %v575 = vpop.permute.xlu0 %574
        %576 = vrot.lane.b32.xlu0 %v468, 96
        %v577 = vpop.permute.xlu0 %576
        %578 = vrot.lane.b32.xlu0 %v469, 96
        %v579 = vpop.permute.xlu0 %578
        %580 = vrot.lane.b32.xlu0 %v470, 96
        %v581 = vpop.permute.xlu0 %580
        %582 = vrot.lane.b32.xlu0 %v471, 96
        %v583 = vpop.permute.xlu0 %582
        %v585 = vsel %vm180, %v374, 0
        %v588 = vsel %vm180, %v379, 0
        %v591 = vsel %vm180, %v384, 0
        %v594 = vsel %vm180, %v389, 0
        %v596 = vsel %vm180, %v553, 0
        %v598 = vsel %vm180, %v555, 0
        %v600 = vsel %vm180, %v557, 0
        %v602 = vsel %vm180, %v559, 0
        %v604 = vsel %vm180, %v561, 0
        %v606 = vsel %vm180, %v563, 0
        %v608 = vsel %vm180, %v565, 0
        %v610 = vsel %vm180, %v567, 0
        %v612 = vsel %vm180, %v569, 0
        %v614 = vsel %vm180, %v571, 0
        %v616 = vsel %vm180, %v573, 0
        %v618 = vsel %vm180, %v575, 0
        %v620 = vsel %vm180, %v577, 0
        %v622 = vsel %vm180, %v579, 0
        %v624 = vsel %vm180, %v581, 0
        %v626 = vsel %vm180, %v583, 0
        %628 = vmatprep.subr.mxu0 0.0
        %629 = vmatpush1.xpose.msra.mxu0 %v626
        %630 = vmatprep.subr.mxu0 0.0
        %631 = vmatpush1.xpose.msra.mxu0 %v624
        %632 = vmatprep.subr.mxu0 0.0
        %633 = vmatpush1.xpose.msra.mxu0 %v622
        %634 = vmatprep.subr.mxu0 0.0
        %635 = vmatpush1.xpose.msra.mxu0 %v620
        %636 = vmatprep.subr.mxu0 0.0
        %637 = vmatpush1.xpose.msra.mxu0 %v618
        %638 = vmatprep.subr.mxu0 0.0
        %639 = vmatpush1.xpose.msra.mxu0 %v616
        %640 = vmatprep.subr.mxu0 0.0
        %641 = vmatpush1.xpose.msra.mxu0 %v614
        %642 = vmatprep.subr.mxu0 0.0
        %643 = vmatpush1.xpose.msra.mxu0 %v612
        %644 = vmatprep.subr.mxu0 0.0
        %645 = vmatpush1.xpose.msra.mxu0 %v610
        %646 = vmatprep.subr.mxu0 0.0
        %647 = vmatpush1.xpose.msra.mxu0 %v608
        %648 = vmatprep.subr.mxu0 0.0
        %649 = vmatpush1.xpose.msra.mxu0 %v606
        %650 = vmatprep.subr.mxu0 0.0
        %651 = vmatpush1.xpose.msra.mxu0 %v604
        %652 = vmatprep.subr.mxu0 0.0
        %653 = vmatpush1.xpose.msra.mxu0 %v602
        %654 = vmatprep.subr.mxu0 0.0
        %655 = vmatpush1.xpose.msra.mxu0 %v600
        %656 = vmatprep.subr.mxu0 0.0
        %657 = vmatpush1.xpose.msra.mxu0 %v598
        %658 = vmatprep.subr.mxu0 0.0
        %659 = vmatpush1.xpose.msra.mxu0 %v596
        %660 = vmatprep.subr.mxu0 0.0
        %661 = vmatpush2.xpose.msra.mxu0 0.0
        %662 = vmatprep.subr.mxu0 0.0
        %663 = vmatpush2.xpose.msra.mxu0 0.0
        %664 = vmatprep.subr.mxu0 0.0
        %665 = vmatpush2.xpose.msra.mxu0 0.0
        %666 = vmatprep.subr.mxu0 0.0
        %667 = vmatpush2.xpose.msra.mxu0 0.0
        %668 = vmatprep.subr.mxu0 0.0
        %669 = vmatpush2.xpose.msra.mxu0 0.0
        %670 = vmatprep.subr.mxu0 0.0
        %671 = vmatpush2.xpose.msra.mxu0 0.0
        %672 = vmatprep.subr.mxu0 0.0
        %673 = vmatpush2.xpose.msra.mxu0 0.0
        %674 = vmatprep.subr.mxu0 0.0
        %675 = vmatpush2.xpose.msra.mxu0 0.0
        %676 = vmatprep.subr.mxu0 0.0
        %677 = vmatpush2.xpose.msra.mxu0 0.0
        %678 = vmatprep.subr.mxu0 0.0
        %679 = vmatpush2.xpose.msra.mxu0 0.0
        %680 = vmatprep.subr.mxu0 0.0
        %681 = vmatpush2.xpose.msra.mxu0 0.0
        %682 = vmatprep.subr.mxu0 0.0
        %683 = vmatpush2.xpose.msra.mxu0 0.0
        %684 = vmatprep.subr.mxu0 0.0
        %685 = vmatpush2.xpose.msra.mxu0 0.0
        %686 = vmatprep.subr.mxu0 0.0
        %687 = vmatpush2.xpose.msra.mxu0 0.0
        %688 = vmatprep.subr.mxu0 0.0
        %689 = vmatpush2.xpose.msra.mxu0 0.0
        %690 = vmatprep.subr.mxu0 0.0
        %691 = vmatpush2.xpose.msra.mxu0 0.0
        %692 = vmatprep.mubr.f32.mxu0 0.0
        %693 = vmatmul.mubr.f32.gmra.mxu0 %v585
        %v694 = vpop.f32.mrf.mxu0
        %v695 = vadd.f32 0.0, %v694
        %v696 = vpop.f32.mrf.mxu0
        %697 = vmatprep.mubr.f32.mxu0 0.0
        %698 = vmatmul.mubr.f32.gmra.mxu0 %v588
        %v699 = vpop.f32.mrf.mxu0
        %v700 = vadd.f32 0.0, %v699
        %v701 = vpop.f32.mrf.mxu0
        %702 = vmatprep.mubr.f32.mxu0 0.0
        %703 = vmatmul.mubr.f32.gmra.mxu0 %v591
        %v704 = vpop.f32.mrf.mxu0
        %v705 = vadd.f32 0.0, %v704
        %v706 = vpop.f32.mrf.mxu0
        %707 = vmatprep.mubr.f32.mxu0 0.0
        %708 = vmatmul.mubr.f32.gmra.mxu0 %v594
        %v709 = vpop.f32.mrf.mxu0
        %v710 = vadd.f32 0.0, %v709
        %v711 = vpop.f32.mrf.mxu0
        %712 = vdwg.mxu0
        %713 = vmax.xlane.f32.xlu0 %v695
        %v714 = vpop.xlane.xlu0 %713
        %715 = vmax.xlane.f32.xlu0 %v700
        %v716 = vpop.xlane.xlu0 %715
        %717 = vmax.xlane.f32.xlu0 %v705
        %v718 = vpop.xlane.xlu0 %717
        %719 = vmax.xlane.f32.xlu0 %v710
        %v720 = vpop.xlane.xlu0 %719
        %v721 = vsub.f32 %v695, %v714
        %v722 = vsub.f32 %v700, %v716
        %v723 = vsub.f32 %v705, %v718
        %v724 = vsub.f32 %v710, %v720
        %v725 = vmul.f32 %v721, 1.442695
        %v726 = vpow.pop %v725
        %v727 = vmul.f32 %v722, 1.442695
        %v728 = vpow.pop %v727
        %v729 = vmul.f32 %v723, 1.442695
        %v730 = vpow.pop %v729
        %v731 = vmul.f32 %v724, 1.442695
        %v732 = vpow.pop %v731
        %749 = vrot.lane.b32.xlu0 %v520, 64
        %v750 = vpop.permute.xlu0 %749
        %751 = vrot.lane.b32.xlu0 %v521, 64
        %v752 = vpop.permute.xlu0 %751
        %753 = vrot.lane.b32.xlu0 %v522, 64
        %v754 = vpop.permute.xlu0 %753
        %755 = vrot.lane.b32.xlu0 %v523, 64
        %v756 = vpop.permute.xlu0 %755
        %757 = vrot.lane.b32.xlu0 %v524, 64
        %v758 = vpop.permute.xlu0 %757
        %759 = vrot.lane.b32.xlu0 %v525, 64
        %v760 = vpop.permute.xlu0 %759
        %761 = vrot.lane.b32.xlu0 %v526, 64
        %v762 = vpop.permute.xlu0 %761
        %763 = vrot.lane.b32.xlu0 %v527, 64
        %v764 = vpop.permute.xlu0 %763
        %765 = vrot.lane.b32.xlu0 %v528, 64
        %v766 = vpop.permute.xlu0 %765
        %767 = vrot.lane.b32.xlu0 %v529, 64
        %v768 = vpop.permute.xlu0 %767
        %769 = vrot.lane.b32.xlu0 %v530, 64
        %v770 = vpop.permute.xlu0 %769
        %771 = vrot.lane.b32.xlu0 %v531, 64
        %v772 = vpop.permute.xlu0 %771
        %773 = vrot.lane.b32.xlu0 %v532, 64
        %v774 = vpop.permute.xlu0 %773
        %775 = vrot.lane.b32.xlu0 %v533, 64
        %v776 = vpop.permute.xlu0 %775
        %777 = vrot.lane.b32.xlu0 %v534, 64
        %v778 = vpop.permute.xlu0 %777
        %779 = vrot.lane.b32.xlu0 %v535, 64
        %v780 = vpop.permute.xlu0 %779
        %797 = vmatprep.subr.mxu0 0.0
        %798 = vmatpush1.msra.mxu0 %v780
        %799 = vmatprep.subr.mxu0 0.0
        %800 = vmatpush1.msra.mxu0 %v778
        %801 = vmatprep.subr.mxu0 0.0
        %802 = vmatpush1.msra.mxu0 %v776
        %803 = vmatprep.subr.mxu0 0.0
        %804 = vmatpush1.msra.mxu0 %v774
        %805 = vmatprep.subr.mxu0 0.0
        %806 = vmatpush1.msra.mxu0 %v772
        %807 = vmatprep.subr.mxu0 0.0
        %808 = vmatpush1.msra.mxu0 %v770
        %809 = vmatprep.subr.mxu0 0.0
        %810 = vmatpush1.msra.mxu0 %v768
        %811 = vmatprep.subr.mxu0 0.0
        %812 = vmatpush1.msra.mxu0 %v766
        %813 = vmatprep.subr.mxu0 0.0
        %814 = vmatpush1.msra.mxu0 %v764
        %815 = vmatprep.subr.mxu0 0.0
        %816 = vmatpush1.msra.mxu0 %v762
        %817 = vmatprep.subr.mxu0 0.0
        %818 = vmatpush1.msra.mxu0 %v760
        %819 = vmatprep.subr.mxu0 0.0
        %820 = vmatpush1.msra.mxu0 %v758
        %821 = vmatprep.subr.mxu0 0.0
        %822 = vmatpush1.msra.mxu0 %v756
        %823 = vmatprep.subr.mxu0 0.0
        %824 = vmatpush1.msra.mxu0 %v754
        %825 = vmatprep.subr.mxu0 0.0
        %826 = vmatpush1.msra.mxu0 %v752
        %827 = vmatprep.subr.mxu0 0.0
        %828 = vmatpush1.msra.mxu0 %v750
        %829 = vmatprep.subr.mxu0 0.0
        %830 = vmatpush2.msra.mxu0 0.0
        %831 = vmatprep.subr.mxu0 0.0
        %832 = vmatpush2.msra.mxu0 0.0
        %833 = vmatprep.subr.mxu0 0.0
        %834 = vmatpush2.msra.mxu0 0.0
        %835 = vmatprep.subr.mxu0 0.0
        %836 = vmatpush2.msra.mxu0 0.0
        %837 = vmatprep.subr.mxu0 0.0
        %838 = vmatpush2.msra.mxu0 0.0
        %839 = vmatprep.subr.mxu0 0.0
        %840 = vmatpush2.msra.mxu0 0.0
        %841 = vmatprep.subr.mxu0 0.0
        %842 = vmatpush2.msra.mxu0 0.0
        %843 = vmatprep.subr.mxu0 0.0
        %844 = vmatpush2.msra.mxu0 0.0
        %845 = vmatprep.subr.mxu0 0.0
        %846 = vmatpush2.msra.mxu0 0.0
        %847 = vmatprep.subr.mxu0 0.0
        %848 = vmatpush2.msra.mxu0 0.0
        %849 = vmatprep.subr.mxu0 0.0
        %850 = vmatpush2.msra.mxu0 0.0
        %851 = vmatprep.subr.mxu0 0.0
        %852 = vmatpush2.msra.mxu0 0.0
        %853 = vmatprep.subr.mxu0 0.0
        %854 = vmatpush2.msra.mxu0 0.0
        %855 = vmatprep.subr.mxu0 0.0
        %856 = vmatpush2.msra.mxu0 0.0
        %857 = vmatprep.subr.mxu0 0.0
        %858 = vmatpush2.msra.mxu0 0.0
        %859 = vmatprep.subr.mxu0 0.0
        %860 = vmatpush2.msra.mxu0 0.0
        %861 = vmatprep.mubr.f32.mxu0 0.0
        %862 = vmatmul.mubr.f32.gmra.mxu0 %v726
        %v863 = vpop.f32.mrf.mxu0
        %v864 = vadd.f32 0.0, %v863
        %v865 = vpop.f32.mrf.mxu0
        %866 = vmatprep.mubr.f32.mxu0 0.0
        %867 = vmatmul.mubr.f32.gmra.mxu0 %v728
        %v868 = vpop.f32.mrf.mxu0
        %v869 = vadd.f32 0.0, %v868
        %v870 = vpop.f32.mrf.mxu0
        %871 = vmatprep.mubr.f32.mxu0 0.0
        %872 = vmatmul.mubr.f32.gmra.mxu0 %v730
        %v873 = vpop.f32.mrf.mxu0
        %v874 = vadd.f32 0.0, %v873
        %v875 = vpop.f32.mrf.mxu0
        %876 = vmatprep.mubr.f32.mxu0 0.0
        %877 = vmatmul.mubr.f32.gmra.mxu0 %v732
        %v878 = vpop.f32.mrf.mxu0
        %v879 = vadd.f32 0.0, %v878
        %v880 = vpop.f32.mrf.mxu0
        %881 = vdwg.mxu0
        %882 = vmatprep.subr.mxu0 0.0
        %883 = vmatpush1.msra.mxu0 %v171
        %884 = vmatprep.subr.mxu0 0.0
        %885 = vmatpush1.msra.mxu0 %v170
        %886 = vmatprep.subr.mxu0 0.0
        %887 = vmatpush1.msra.mxu0 %v169
        %888 = vmatprep.subr.mxu0 0.0
        %889 = vmatpush1.msra.mxu0 %v168
        %890 = vmatprep.subr.mxu0 0.0
        %891 = vmatpush1.msra.mxu0 %v167
        %892 = vmatprep.subr.mxu0 0.0
        %893 = vmatpush1.msra.mxu0 %v166
        %894 = vmatprep.subr.mxu0 0.0
        %895 = vmatpush1.msra.mxu0 %v165
        %896 = vmatprep.subr.mxu0 0.0
        %897 = vmatpush1.msra.mxu0 %v164
        %898 = vmatprep.subr.mxu0 0.0
        %899 = vmatpush1.msra.mxu0 %v163
        %900 = vmatprep.subr.mxu0 0.0
        %901 = vmatpush1.msra.mxu0 %v162
        %902 = vmatprep.subr.mxu0 0.0
        %903 = vmatpush1.msra.mxu0 %v161
        %904 = vmatprep.subr.mxu0 0.0
        %905 = vmatpush1.msra.mxu0 %v160
        %906 = vmatprep.subr.mxu0 0.0
        %907 = vmatpush1.msra.mxu0 %v159
        %908 = vmatprep.subr.mxu0 0.0
        %909 = vmatpush1.msra.mxu0 %v158
        %910 = vmatprep.subr.mxu0 0.0
        %911 = vmatpush1.msra.mxu0 %v157
        %912 = vmatprep.subr.mxu0 0.0
        %913 = vmatpush1.msra.mxu0 %v156
        %914 = vmatprep.subr.mxu0 0.0
        %915 = vmatpush2.msra.mxu0 0.0
        %916 = vmatprep.subr.mxu0 0.0
        %917 = vmatpush2.msra.mxu0 0.0
        %918 = vmatprep.subr.mxu0 0.0
        %919 = vmatpush2.msra.mxu0 0.0
        %920 = vmatprep.subr.mxu0 0.0
        %921 = vmatpush2.msra.mxu0 0.0
        %922 = vmatprep.subr.mxu0 0.0
        %923 = vmatpush2.msra.mxu0 0.0
        %924 = vmatprep.subr.mxu0 0.0
        %925 = vmatpush2.msra.mxu0 0.0
        %926 = vmatprep.subr.mxu0 0.0
        %927 = vmatpush2.msra.mxu0 0.0
        %928 = vmatprep.subr.mxu0 0.0
        %929 = vmatpush2.msra.mxu0 0.0
        %930 = vmatprep.subr.mxu0 0.0
        %931 = vmatpush2.msra.mxu0 0.0
        %932 = vmatprep.subr.mxu0 0.0
        %933 = vmatpush2.msra.mxu0 0.0
        %934 = vmatprep.subr.mxu0 0.0
        %935 = vmatpush2.msra.mxu0 0.0
        %936 = vmatprep.subr.mxu0 0.0
        %937 = vmatpush2.msra.mxu0 0.0
        %938 = vmatprep.subr.mxu0 0.0
        %939 = vmatpush2.msra.mxu0 0.0
        %940 = vmatprep.subr.mxu0 0.0
        %941 = vmatpush2.msra.mxu0 0.0
        %942 = vmatprep.subr.mxu0 0.0
        %943 = vmatpush2.msra.mxu0 0.0
        %944 = vmatprep.subr.mxu0 0.0
        %945 = vmatpush2.msra.mxu0 0.0
        %946 = vmatprep.mubr.f32.mxu0 0.0
        %947 = vmatmul.mubr.f32.gmra.mxu0 %v726
        %v948 = vpop.f32.mrf.mxu0
        %v949 = vadd.f32 0.0, %v948
        %v950 = vpop.f32.mrf.mxu0
        %951 = vmatprep.mubr.f32.mxu0 0.0
        %952 = vmatmul.mubr.f32.gmra.mxu0 %v728
        %v953 = vpop.f32.mrf.mxu0
        %v954 = vadd.f32 0.0, %v953
        %v955 = vpop.f32.mrf.mxu0
        %956 = vmatprep.mubr.f32.mxu0 0.0
        %957 = vmatmul.mubr.f32.gmra.mxu0 %v730
        %v958 = vpop.f32.mrf.mxu0
        %v959 = vadd.f32 0.0, %v958
        %v960 = vpop.f32.mrf.mxu0
        %961 = vmatprep.mubr.f32.mxu0 0.0
        %962 = vmatmul.mubr.f32.gmra.mxu0 %v732
        %v963 = vpop.f32.mrf.mxu0
        %v964 = vadd.f32 0.0, %v963
        %v965 = vpop.f32.mrf.mxu0
        %966 = vdwg.mxu0
        %v967 = vrcp.pop %v949
        %v968 = vrcp.pop %v954
        %v969 = vrcp.pop %v959
        %v970 = vrcp.pop %v964
        %v971 = vmul.f32 %v864, %v967
        %v972 = vmul.f32 %v869, %v968
        %v973 = vmul.f32 %v874, %v969
        %v974 = vmul.f32 %v879, %v970
        %v975 = vld [vmem:[#allocation2 + $0xe0] sm:$0xff]
        %v976 = vld [vmem:[#allocation2 + $0xe8] sm:$0xff]
        %v977 = vld [vmem:[#allocation2 + $0xf0] sm:$0xff]
        %v978 = vld [vmem:[#allocation2 + $0xf8] sm:$0xff]
        %v979 = vlaneseq
        %v980 = vshrl.u32 %v979, 7
        %v981 = vsub.s32 1, %v980
        %v982 = vrot.slane %v286, %v981
        %v984 = vsel %vm180, %v971, 0
        %v987 = vsel %vm180, %v972, 0
        %v990 = vsel %vm180, %v973, 0
        %v993 = vsel %vm180, %v974, 0
        %995 = vmatprep.subr.mxu0 0.0
        %996 = vmatpush1.msra.mxu0 0.0
        %997 = vmatprep.subr.mxu0 0.0
        %998 = vmatpush1.msra.mxu0 0.0
        %999 = vmatprep.subr.mxu0 0.0
        %1000 = vmatpush1.msra.mxu0 0.0
        %1001 = vmatprep.subr.mxu0 0.0
        %1002 = vmatpush1.msra.mxu0 0.0
        %1003 = vmatprep.subr.mxu0 0.0
        %1004 = vmatpush1.msra.mxu0 0.0
        %1005 = vmatprep.subr.mxu0 0.0
        %1006 = vmatpush1.msra.mxu0 0.0
        %1007 = vmatprep.subr.mxu0 0.0
        %1008 = vmatpush1.msra.mxu0 0.0
        %1009 = vmatprep.subr.mxu0 0.0
        %1010 = vmatpush1.msra.mxu0 0.0
        %1011 = vmatprep.subr.mxu0 0.0
        %1012 = vmatpush1.msra.mxu0 0.0
        %1013 = vmatprep.subr.mxu0 0.0
        %1014 = vmatpush1.msra.mxu0 0.0
        %1015 = vmatprep.subr.mxu0 0.0
        %1016 = vmatpush1.msra.mxu0 0.0
        %1017 = vmatprep.subr.mxu0 0.0
        %1018 = vmatpush1.msra.mxu0 0.0
        %1019 = vmatprep.subr.mxu0 0.0
        %1020 = vmatpush1.msra.mxu0 %v978
        %1021 = vmatprep.subr.mxu0 0.0
        %1022 = vmatpush1.msra.mxu0 %v977
        %1023 = vmatprep.subr.mxu0 0.0
        %1024 = vmatpush1.msra.mxu0 %v976
        %1025 = vmatprep.subr.mxu0 0.0
        %1026 = vmatpush1.msra.mxu0 %v975
        %1027 = vmatprep.subr.mxu0 0.0
        %1028 = vmatpush2.msra.mxu0 0.0
        %1029 = vmatprep.subr.mxu0 0.0
        %1030 = vmatpush2.msra.mxu0 0.0
        %1031 = vmatprep.subr.mxu0 0.0
        %1032 = vmatpush2.msra.mxu0 0.0
        %1033 = vmatprep.subr.mxu0 0.0
        %1034 = vmatpush2.msra.mxu0 0.0
        %1035 = vmatprep.subr.mxu0 0.0
        %1036 = vmatpush2.msra.mxu0 0.0
        %1037 = vmatprep.subr.mxu0 0.0
        %1038 = vmatpush2.msra.mxu0 0.0
        %1039 = vmatprep.subr.mxu0 0.0
        %1040 = vmatpush2.msra.mxu0 0.0
        %1041 = vmatprep.subr.mxu0 0.0
        %1042 = vmatpush2.msra.mxu0 0.0
        %1043 = vmatprep.subr.mxu0 0.0
        %1044 = vmatpush2.msra.mxu0 0.0
        %1045 = vmatprep.subr.mxu0 0.0
        %1046 = vmatpush2.msra.mxu0 0.0
        %1047 = vmatprep.subr.mxu0 0.0
        %1048 = vmatpush2.msra.mxu0 0.0
        %1049 = vmatprep.subr.mxu0 0.0
        %1050 = vmatpush2.msra.mxu0 0.0
        %1051 = vmatprep.subr.mxu0 0.0
        %1052 = vmatpush2.msra.mxu0 0.0
        %1053 = vmatprep.subr.mxu0 0.0
        %1054 = vmatpush2.msra.mxu0 0.0
        %1055 = vmatprep.subr.mxu0 0.0
        %1056 = vmatpush2.msra.mxu0 0.0
        %1057 = vmatprep.subr.mxu0 0.0
        %1058 = vmatpush2.msra.mxu0 0.0
        %1059 = vmatprep.mubr.f32.mxu0 0.0
        %1060 = vmatmul.mubr.f32.gmra.mxu0 %v984
        %v1061 = vpop.f32.mrf.mxu0
        %v1062 = vadd.f32 %v982, %v1061
        %v1063 = vpop.f32.mrf.mxu0
        %1064 = vmatprep.mubr.f32.mxu0 0.0
        %1065 = vmatmul.mubr.f32.gmra.mxu0 %v987
        %v1066 = vpop.f32.mrf.mxu0
        %v1067 = vadd.f32 %v982, %v1066
        %v1068 = vpop.f32.mrf.mxu0
        %1069 = vmatprep.mubr.f32.mxu0 0.0
        %1070 = vmatmul.mubr.f32.gmra.mxu0 %v990
        %v1071 = vpop.f32.mrf.mxu0
        %v1072 = vadd.f32 %v982, %v1071
        %v1073 = vpop.f32.mrf.mxu0
        %1074 = vmatprep.mubr.f32.mxu0 0.0
        %1075 = vmatmul.mubr.f32.gmra.mxu0 %v993
        %v1076 = vpop.f32.mrf.mxu0
        %v1077 = vadd.f32 %v982, %v1076
        %v1078 = vpop.f32.mrf.mxu0
        %1079 = vdwg.mxu0
        %v1080 = vadd.f32 %v282, %v1062
        %v1081 = vadd.f32 %v283, %v1067
        %v1082 = vadd.f32 %v284, %v1072
        %v1083 = vadd.f32 %v285, %v1077
        %v1084 = vsel %vm180, %v1080, 0.0
        %1085 = vadd.xlane.f32.xlu0 %v1084
        %v1086 = vpop.xlane.xlu0 %1085
        %v1087 = vsel %vm180, %v1081, 0.0
        %1088 = vadd.xlane.f32.xlu0 %v1087
        %v1089 = vpop.xlane.xlu0 %1088
        %v1090 = vsel %vm180, %v1082, 0.0
        %1091 = vadd.xlane.f32.xlu0 %v1090
        %v1092 = vpop.xlane.xlu0 %1091
        %v1093 = vsel %vm180, %v1083, 0.0
        %1094 = vadd.xlane.f32.xlu0 %v1093
        %v1095 = vpop.xlane.xlu0 %1094
        %v1096 = vrcp.pop 32.0
        %v1097 = vmul.f32 %v1086, %v1096
        %v1098 = vmul.f32 %v1089, %v1096
        %v1099 = vmul.f32 %v1092, %v1096
        %v1100 = vmul.f32 %v1095, %v1096
        %v1101 = vsub.f32 %v1080, %v1097
        %v1102 = vsub.f32 %v1081, %v1098
        %v1103 = vsub.f32 %v1082, %v1099
        %v1104 = vsub.f32 %v1083, %v1100
        %v1105 = vmul.f32 %v1101, %v1101
        %v1106 = vmul.f32 %v1102, %v1102
        %v1107 = vmul.f32 %v1103, %v1103
        %v1108 = vmul.f32 %v1104, %v1104
        %v1109 = vsel %vm180, %v1105, 0.0
        %1110 = vadd.xlane.f32.xlu0 %v1109
        %v1111 = vpop.xlane.xlu0 %1110
        %v1112 = vsel %vm180, %v1106, 0.0
        %1113 = vadd.xlane.f32.xlu0 %v1112
        %v1114 = vpop.xlane.xlu0 %1113
        %v1115 = vsel %vm180, %v1107, 0.0
        %1116 = vadd.xlane.f32.xlu0 %v1115
        %v1117 = vpop.xlane.xlu0 %1116
        %v1118 = vsel %vm180, %v1108, 0.0
        %1119 = vadd.xlane.f32.xlu0 %v1118
        %v1120 = vpop.xlane.xlu0 %1119
        %v1121 = vmul.f32 %v1111, %v1096
        %v1122 = vmul.f32 %v1114, %v1096
        %v1123 = vmul.f32 %v1117, %v1096
        %v1124 = vmul.f32 %v1120, %v1096
        %v1125 = vadd.f32 %v1121, 1e-05
        %v1126 = vadd.f32 %v1122, 1e-05
        %v1127 = vadd.f32 %v1123, 1e-05
        %v1128 = vadd.f32 %v1124, 1e-05
        %v1129 = vrsqrt.pop %v1125
        %v1130 = vrsqrt.pop %v1126
        %v1131 = vrsqrt.pop %v1127
        %v1132 = vrsqrt.pop %v1128
        %v1133 = vmul.f32 %v1101, %v1129
        %v1134 = vmul.f32 %v1102, %v1130
        %v1135 = vmul.f32 %v1103, %v1131
        %v1136 = vmul.f32 %v1104, %v1132
        %v1137 = vlaneseq
        %v1138 = vshrl.u32 %v1137, 7
        %v1139 = vsub.s32 2, %v1138
        %v1140 = vrot.slane %v286, %v1139
        %v1141 = vmul.f32 %v1133, %v1140
        %v1142 = vmul.f32 %v1134, %v1140
        %v1143 = vmul.f32 %v1135, %v1140
        %v1144 = vmul.f32 %v1136, %v1140
        %v1145 = vlaneseq
        %v1146 = vshrl.u32 %v1145, 7
        %v1147 = vsub.s32 3, %v1146
        %v1148 = vrot.slane %v286, %v1147
        %v1149 = vadd.f32 %v1141, %v1148
        %v1150 = vadd.f32 %v1142, %v1148
        %v1151 = vadd.f32 %v1143, %v1148
        %v1152 = vadd.f32 %v1144, %v1148
        %v1153 = vld [vmem:[#allocation2 + $0x100] sm:$0xff]
        %v1154 = vld [vmem:[#allocation2 + $0x108] sm:$0xff]
        %v1155 = vld [vmem:[#allocation2 + $0x110] sm:$0xff]
        %v1156 = vld [vmem:[#allocation2 + $0x118] sm:$0xff]
        %v1157 = vlaneseq
        %v1158 = vshrl.u32 %v1157, 7
        %v1159 = vsub.s32 4, %v1158
        %v1160 = vrot.slane %v286, %v1159
        %v1162 = vsel %vm180, %v1149, 0
        %v1165 = vsel %vm180, %v1150, 0
        %v1168 = vsel %vm180, %v1151, 0
        %v1171 = vsel %vm180, %v1152, 0
        %1173 = vmatprep.subr.mxu0 0.0
        %1174 = vmatpush1.msra.mxu0 0.0
        %1175 = vmatprep.subr.mxu0 0.0
        %1176 = vmatpush1.msra.mxu0 0.0
        %1177 = vmatprep.subr.mxu0 0.0
        %1178 = vmatpush1.msra.mxu0 0.0
        %1179 = vmatprep.subr.mxu0 0.0
        %1180 = vmatpush1.msra.mxu0 0.0
        %1181 = vmatprep.subr.mxu0 0.0
        %1182 = vmatpush1.msra.mxu0 0.0
        %1183 = vmatprep.subr.mxu0 0.0
        %1184 = vmatpush1.msra.mxu0 0.0
        %1185 = vmatprep.subr.mxu0 0.0
        %1186 = vmatpush1.msra.mxu0 0.0
        %1187 = vmatprep.subr.mxu0 0.0
        %1188 = vmatpush1.msra.mxu0 0.0
        %1189 = vmatprep.subr.mxu0 0.0
        %1190 = vmatpush1.msra.mxu0 0.0
        %1191 = vmatprep.subr.mxu0 0.0
        %1192 = vmatpush1.msra.mxu0 0.0
        %1193 = vmatprep.subr.mxu0 0.0
        %1194 = vmatpush1.msra.mxu0 0.0
        %1195 = vmatprep.subr.mxu0 0.0
        %1196 = vmatpush1.msra.mxu0 0.0
        %1197 = vmatprep.subr.mxu0 0.0
        %1198 = vmatpush1.msra.mxu0 %v1156
        %1199 = vmatprep.subr.mxu0 0.0
        %1200 = vmatpush1.msra.mxu0 %v1155
        %1201 = vmatprep.subr.mxu0 0.0
        %1202 = vmatpush1.msra.mxu0 %v1154
        %1203 = vmatprep.subr.mxu0 0.0
        %1204 = vmatpush1.msra.mxu0 %v1153
        %1205 = vmatprep.subr.mxu0 0.0
        %1206 = vmatpush2.msra.mxu0 0.0
        %1207 = vmatprep.subr.mxu0 0.0
        %1208 = vmatpush2.msra.mxu0 0.0
        %1209 = vmatprep.subr.mxu0 0.0
        %1210 = vmatpush2.msra.mxu0 0.0
        %1211 = vmatprep.subr.mxu0 0.0
        %1212 = vmatpush2.msra.mxu0 0.0
        %1213 = vmatprep.subr.mxu0 0.0
        %1214 = vmatpush2.msra.mxu0 0.0
        %1215 = vmatprep.subr.mxu0 0.0
        %1216 = vmatpush2.msra.mxu0 0.0
        %1217 = vmatprep.subr.mxu0 0.0
        %1218 = vmatpush2.msra.mxu0 0.0
        %1219 = vmatprep.subr.mxu0 0.0
        %1220 = vmatpush2.msra.mxu0 0.0
        %1221 = vmatprep.subr.mxu0 0.0
        %1222 = vmatpush2.msra.mxu0 0.0
        %1223 = vmatprep.subr.mxu0 0.0
        %1224 = vmatpush2.msra.mxu0 0.0
        %1225 = vmatprep.subr.mxu0 0.0
        %1226 = vmatpush2.msra.mxu0 0.0
        %1227 = vmatprep.subr.mxu0 0.0
        %1228 = vmatpush2.msra.mxu0 0.0
        %1229 = vmatprep.subr.mxu0 0.0
        %1230 = vmatpush2.msra.mxu0 0.0
        %1231 = vmatprep.subr.mxu0 0.0
        %1232 = vmatpush2.msra.mxu0 0.0
        %1233 = vmatprep.subr.mxu0 0.0
        %1234 = vmatpush2.msra.mxu0 0.0
        %1235 = vmatprep.subr.mxu0 0.0
        %1236 = vmatpush2.msra.mxu0 0.0
        %1237 = vmatprep.mubr.f32.mxu0 0.0
        %1238 = vmatmul.mubr.f32.gmra.mxu0 %v1162
        %v1239 = vpop.f32.mrf.mxu0
        %v1240 = vadd.f32 %v1160, %v1239
        %v1241 = vpop.f32.mrf.mxu0
        %1242 = vmatprep.mubr.f32.mxu0 0.0
        %1243 = vmatmul.mubr.f32.gmra.mxu0 %v1165
        %v1244 = vpop.f32.mrf.mxu0
        %v1245 = vadd.f32 %v1160, %v1244
        %v1246 = vpop.f32.mrf.mxu0
        %1247 = vmatprep.mubr.f32.mxu0 0.0
        %1248 = vmatmul.mubr.f32.gmra.mxu0 %v1168
        %v1249 = vpop.f32.mrf.mxu0
        %v1250 = vadd.f32 %v1160, %v1249
        %v1251 = vpop.f32.mrf.mxu0
        %1252 = vmatprep.mubr.f32.mxu0 0.0
        %1253 = vmatmul.mubr.f32.gmra.mxu0 %v1171
        %v1254 = vpop.f32.mrf.mxu0
        %v1255 = vadd.f32 %v1160, %v1254
        %v1256 = vpop.f32.mrf.mxu0
        %1257 = vdwg.mxu0
        %v1258 = vmax.f32 %v1240, 0.0
        %v1259 = vmax.f32 %v1245, 0.0
        %v1260 = vmax.f32 %v1250, 0.0
        %v1261 = vmax.f32 %v1255, 0.0
        %v1262 = vld [vmem:[#allocation2 + $0x120] sm:$0xff]
        %v1263 = vld [vmem:[#allocation2 + $0x128] sm:$0xff]
        %v1264 = vld [vmem:[#allocation2 + $0x130] sm:$0xff]
        %v1265 = vld [vmem:[#allocation2 + $0x138] sm:$0xff]
        %v1266 = vlaneseq
        %v1267 = vshrl.u32 %v1266, 7
        %v1268 = vsub.s32 5, %v1267
        %v1269 = vrot.slane %v286, %v1268
        %vm1270 = vcmask 523264
        %v1272 = vsel %vm1270, %v1258, 0
        %v1275 = vsel %vm1270, %v1259, 0
        %v1278 = vsel %vm1270, %v1260, 0
        %v1281 = vsel %vm1270, %v1261, 0
        %v1284 = vsel %vm1270, %v1262, 0
        %v1287 = vsel %vm1270, %v1263, 0
        %v1290 = vsel %vm1270, %v1264, 0
        %v1293 = vsel %vm1270, %v1265, 0
        %1295 = vmatprep.subr.mxu0 0.0
        %1296 = vmatpush1.xpose.msra.mxu0 0.0
        %1297 = vmatprep.subr.mxu0 0.0
        %1298 = vmatpush1.xpose.msra.mxu0 0.0
        %1299 = vmatprep.subr.mxu0 0.0
        %1300 = vmatpush1.xpose.msra.mxu0 0.0
        %1301 = vmatprep.subr.mxu0 0.0
        %1302 = vmatpush1.xpose.msra.mxu0 0.0
        %1303 = vmatprep.subr.mxu0 0.0
        %1304 = vmatpush1.xpose.msra.mxu0 0.0
        %1305 = vmatprep.subr.mxu0 0.0
        %1306 = vmatpush1.xpose.msra.mxu0 0.0
        %1307 = vmatprep.subr.mxu0 0.0
        %1308 = vmatpush1.xpose.msra.mxu0 0.0
        %1309 = vmatprep.subr.mxu0 0.0
        %1310 = vmatpush1.xpose.msra.mxu0 0.0
        %1311 = vmatprep.subr.mxu0 0.0
        %1312 = vmatpush1.xpose.msra.mxu0 0.0
        %1313 = vmatprep.subr.mxu0 0.0
        %1314 = vmatpush1.xpose.msra.mxu0 0.0
        %1315 = vmatprep.subr.mxu0 0.0
        %1316 = vmatpush1.xpose.msra.mxu0 0.0
        %1317 = vmatprep.subr.mxu0 0.0
        %1318 = vmatpush1.xpose.msra.mxu0 0.0
        %1319 = vmatprep.subr.mxu0 0.0
        %1320 = vmatpush1.xpose.msra.mxu0 %v1293
        %1321 = vmatprep.subr.mxu0 0.0
        %1322 = vmatpush1.xpose.msra.mxu0 %v1290
        %1323 = vmatprep.subr.mxu0 0.0
        %1324 = vmatpush1.xpose.msra.mxu0 %v1287
        %1325 = vmatprep.subr.mxu0 0.0
        %1326 = vmatpush1.xpose.msra.mxu0 %v1284
        %1327 = vmatprep.subr.mxu0 0.0
        %1328 = vmatpush2.xpose.msra.mxu0 0.0
        %1329 = vmatprep.subr.mxu0 0.0
        %1330 = vmatpush2.xpose.msra.mxu0 0.0
        %1331 = vmatprep.subr.mxu0 0.0
        %1332 = vmatpush2.xpose.msra.mxu0 0.0
        %1333 = vmatprep.subr.mxu0 0.0
        %1334 = vmatpush2.xpose.msra.mxu0 0.0
        %1335 = vmatprep.subr.mxu0 0.0
        %1336 = vmatpush2.xpose.msra.mxu0 0.0
        %1337 = vmatprep.subr.mxu0 0.0
        %1338 = vmatpush2.xpose.msra.mxu0 0.0
        %1339 = vmatprep.subr.mxu0 0.0
        %1340 = vmatpush2.xpose.msra.mxu0 0.0
        %1341 = vmatprep.subr.mxu0 0.0
        %1342 = vmatpush2.xpose.msra.mxu0 0.0
        %1343 = vmatprep.subr.mxu0 0.0
        %1344 = vmatpush2.xpose.msra.mxu0 0.0
        %1345 = vmatprep.subr.mxu0 0.0
        %1346 = vmatpush2.xpose.msra.mxu0 0.0
        %1347 = vmatprep.subr.mxu0 0.0
        %1348 = vmatpush2.xpose.msra.mxu0 0.0
        %1349 = vmatprep.subr.mxu0 0.0
        %1350 = vmatpush2.xpose.msra.mxu0 0.0
        %1351 = vmatprep.subr.mxu0 0.0
        %1352 = vmatpush2.xpose.msra.mxu0 0.0
        %1353 = vmatprep.subr.mxu0 0.0
        %1354 = vmatpush2.xpose.msra.mxu0 0.0
        %1355 = vmatprep.subr.mxu0 0.0
        %1356 = vmatpush2.xpose.msra.mxu0 0.0
        %1357 = vmatprep.subr.mxu0 0.0
        %1358 = vmatpush2.xpose.msra.mxu0 0.0
        %1359 = vmatprep.mubr.f32.mxu0 0.0
        %1360 = vmatmul.mubr.f32.gmra.mxu0 %v1272
        %v1361 = vpop.f32.mrf.mxu0
        %v1362 = vadd.f32 %v1269, %v1361
        %v1363 = vpop.f32.mrf.mxu0
        %1364 = vmatprep.mubr.f32.mxu0 0.0
        %1365 = vmatmul.mubr.f32.gmra.mxu0 %v1275
        %v1366 = vpop.f32.mrf.mxu0
        %v1367 = vadd.f32 %v1269, %v1366
        %v1368 = vpop.f32.mrf.mxu0
        %1369 = vmatprep.mubr.f32.mxu0 0.0
        %1370 = vmatmul.mubr.f32.gmra.mxu0 %v1278
        %v1371 = vpop.f32.mrf.mxu0
        %v1372 = vadd.f32 %v1269, %v1371
        %v1373 = vpop.f32.mrf.mxu0
        %1374 = vmatprep.mubr.f32.mxu0 0.0
        %1375 = vmatmul.mubr.f32.gmra.mxu0 %v1281
        %v1376 = vpop.f32.mrf.mxu0
        %v1377 = vadd.f32 %v1269, %v1376
        %v1378 = vpop.f32.mrf.mxu0
        %1379 = vdwg.mxu0
        %v1380 = vadd.f32 %v1149, %v1362
        %v1381 = vadd.f32 %v1150, %v1367
        %v1382 = vadd.f32 %v1151, %v1372
        %v1383 = vadd.f32 %v1152, %v1377
        %v1384 = vsel %vm180, %v1380, 0.0
        %1385 = vadd.xlane.f32.xlu0 %v1384
        %v1386 = vpop.xlane.xlu0 %1385
        %v1387 = vsel %vm180, %v1381, 0.0
        %1388 = vadd.xlane.f32.xlu0 %v1387
        %v1389 = vpop.xlane.xlu0 %1388
        %v1390 = vsel %vm180, %v1382, 0.0
        %1391 = vadd.xlane.f32.xlu0 %v1390
        %v1392 = vpop.xlane.xlu0 %1391
        %v1393 = vsel %vm180, %v1383, 0.0
        %1394 = vadd.xlane.f32.xlu0 %v1393
        %v1395 = vpop.xlane.xlu0 %1394
        %v1396 = vmul.f32 %v1386, %v1096
        %v1397 = vmul.f32 %v1389, %v1096
        %v1398 = vmul.f32 %v1392, %v1096
        %v1399 = vmul.f32 %v1395, %v1096
        %v1400 = vsub.f32 %v1380, %v1396
        %v1401 = vsub.f32 %v1381, %v1397
        %v1402 = vsub.f32 %v1382, %v1398
        %v1403 = vsub.f32 %v1383, %v1399
        %v1404 = vmul.f32 %v1400, %v1400
        %v1405 = vmul.f32 %v1401, %v1401
        %v1406 = vmul.f32 %v1402, %v1402
        %v1407 = vmul.f32 %v1403, %v1403
        %v1408 = vsel %vm180, %v1404, 0.0
        %1409 = vadd.xlane.f32.xlu0 %v1408
        %v1410 = vpop.xlane.xlu0 %1409
        %v1411 = vsel %vm180, %v1405, 0.0
        %1412 = vadd.xlane.f32.xlu0 %v1411
        %v1413 = vpop.xlane.xlu0 %1412
        %v1414 = vsel %vm180, %v1406, 0.0
        %1415 = vadd.xlane.f32.xlu0 %v1414
        %v1416 = vpop.xlane.xlu0 %1415
        %v1417 = vsel %vm180, %v1407, 0.0
        %1418 = vadd.xlane.f32.xlu0 %v1417
        %v1419 = vpop.xlane.xlu0 %1418
        %v1420 = vmul.f32 %v1410, %v1096
        %v1421 = vmul.f32 %v1413, %v1096
        %v1422 = vmul.f32 %v1416, %v1096
        %v1423 = vmul.f32 %v1419, %v1096
        %v1424 = vadd.f32 %v1420, 1e-05
        %v1425 = vadd.f32 %v1421, 1e-05
        %v1426 = vadd.f32 %v1422, 1e-05
        %v1427 = vadd.f32 %v1423, 1e-05
        %v1428 = vrsqrt.pop %v1424
        %v1429 = vrsqrt.pop %v1425
        %v1430 = vrsqrt.pop %v1426
        %v1431 = vrsqrt.pop %v1427
        %v1432 = vmul.f32 %v1400, %v1428
        %v1433 = vmul.f32 %v1401, %v1429
        %v1434 = vmul.f32 %v1402, %v1430
        %v1435 = vmul.f32 %v1403, %v1431
        %v1436 = vlaneseq
        %v1437 = vshrl.u32 %v1436, 7
        %v1438 = vsub.s32 6, %v1437
        %v1439 = vrot.slane %v286, %v1438
        %v1440 = vmul.f32 %v1432, %v1439
        %v1441 = vmul.f32 %v1433, %v1439
        %v1442 = vmul.f32 %v1434, %v1439
        %v1443 = vmul.f32 %v1435, %v1439
        %v1444 = vlaneseq
        %v1445 = vshrl.u32 %v1444, 7
        %v1446 = vsub.s32 7, %v1445
        %v1447 = vrot.slane %v286, %v1446
        %v1448 = vadd.f32 %v1440, %v1447
        %v1449 = vadd.f32 %v1441, %v1447
        %v1450 = vadd.f32 %v1442, %v1447
        %v1451 = vadd.f32 %v1443, %v1447
        %v1452 = vld [vmem:[#allocation2 + $0x1e8] sm:$0xff]
        %v1453 = vld [vmem:[#allocation2 + $0x140] sm:$0xff]
        %v1454 = vld [vmem:[#allocation2 + $0x148] sm:$0xff]
        %v1455 = vld [vmem:[#allocation2 + $0x150] sm:$0xff]
        %v1456 = vld [vmem:[#allocation2 + $0x158] sm:$0xff]
        %v1457 = vlaneseq
        %v1458 = vshrl.u32 %v1457, 7
        %v1459 = vsub.s32 0, %v1458
        %v1460 = vrot.slane %v1452, %v1459
        %v1462 = vsel %vm180, %v1448, 0
        %v1465 = vsel %vm180, %v1449, 0
        %v1468 = vsel %vm180, %v1450, 0
        %v1471 = vsel %vm180, %v1451, 0
        %1473 = vmatprep.subr.mxu0 0.0
        %1474 = vmatpush1.msra.mxu0 0.0
        %1475 = vmatprep.subr.mxu0 0.0
        %1476 = vmatpush1.msra.mxu0 0.0
        %1477 = vmatprep.subr.mxu0 0.0
        %1478 = vmatpush1.msra.mxu0 0.0
        %1479 = vmatprep.subr.mxu0 0.0
        %1480 = vmatpush1.msra.mxu0 0.0
        %1481 = vmatprep.subr.mxu0 0.0
        %1482 = vmatpush1.msra.mxu0 0.0
        %1483 = vmatprep.subr.mxu0 0.0
        %1484 = vmatpush1.msra.mxu0 0.0
        %1485 = vmatprep.subr.mxu0 0.0
        %1486 = vmatpush1.msra.mxu0 0.0
        %1487 = vmatprep.subr.mxu0 0.0
        %1488 = vmatpush1.msra.mxu0 0.0
        %1489 = vmatprep.subr.mxu0 0.0
        %1490 = vmatpush1.msra.mxu0 0.0
        %1491 = vmatprep.subr.mxu0 0.0
        %1492 = vmatpush1.msra.mxu0 0.0
        %1493 = vmatprep.subr.mxu0 0.0
        %1494 = vmatpush1.msra.mxu0 0.0
        %1495 = vmatprep.subr.mxu0 0.0
        %1496 = vmatpush1.msra.mxu0 0.0
        %1497 = vmatprep.subr.mxu0 0.0
        %1498 = vmatpush1.msra.mxu0 %v1456
        %1499 = vmatprep.subr.mxu0 0.0
        %1500 = vmatpush1.msra.mxu0 %v1455
        %1501 = vmatprep.subr.mxu0 0.0
        %1502 = vmatpush1.msra.mxu0 %v1454
        %1503 = vmatprep.subr.mxu0 0.0
        %1504 = vmatpush1.msra.mxu0 %v1453
        %1505 = vmatprep.subr.mxu0 0.0
        %1506 = vmatpush2.msra.mxu0 0.0
        %1507 = vmatprep.subr.mxu0 0.0
        %1508 = vmatpush2.msra.mxu0 0.0
        %1509 = vmatprep.subr.mxu0 0.0
        %1510 = vmatpush2.msra.mxu0 0.0
        %1511 = vmatprep.subr.mxu0 0.0
        %1512 = vmatpush2.msra.mxu0 0.0
        %1513 = vmatprep.subr.mxu0 0.0
        %1514 = vmatpush2.msra.mxu0 0.0
        %1515 = vmatprep.subr.mxu0 0.0
        %1516 = vmatpush2.msra.mxu0 0.0
        %1517 = vmatprep.subr.mxu0 0.0
        %1518 = vmatpush2.msra.mxu0 0.0
        %1519 = vmatprep.subr.mxu0 0.0
        %1520 = vmatpush2.msra.mxu0 0.0
        %1521 = vmatprep.subr.mxu0 0.0
        %1522 = vmatpush2.msra.mxu0 0.0
        %1523 = vmatprep.subr.mxu0 0.0
        %1524 = vmatpush2.msra.mxu0 0.0
        %1525 = vmatprep.subr.mxu0 0.0
        %1526 = vmatpush2.msra.mxu0 0.0
        %1527 = vmatprep.subr.mxu0 0.0
        %1528 = vmatpush2.msra.mxu0 0.0
        %1529 = vmatprep.subr.mxu0 0.0
        %1530 = vmatpush2.msra.mxu0 0.0
        %1531 = vmatprep.subr.mxu0 0.0
        %1532 = vmatpush2.msra.mxu0 0.0
        %1533 = vmatprep.subr.mxu0 0.0
        %1534 = vmatpush2.msra.mxu0 0.0
        %1535 = vmatprep.subr.mxu0 0.0
        %1536 = vmatpush2.msra.mxu0 0.0
        %1537 = vmatprep.mubr.f32.mxu0 0.0
        %1538 = vmatmul.mubr.f32.gmra.mxu0 %v1462
        %v1539 = vpop.f32.mrf.mxu0
        %v1540 = vadd.f32 %v1460, %v1539
        %v1541 = vpop.f32.mrf.mxu0
        %1542 = vmatprep.mubr.f32.mxu0 0.0
        %1543 = vmatmul.mubr.f32.gmra.mxu0 %v1465
        %v1544 = vpop.f32.mrf.mxu0
        %v1545 = vadd.f32 %v1460, %v1544
        %v1546 = vpop.f32.mrf.mxu0
        %1547 = vmatprep.mubr.f32.mxu0 0.0
        %1548 = vmatmul.mubr.f32.gmra.mxu0 %v1468
        %v1549 = vpop.f32.mrf.mxu0
        %v1550 = vadd.f32 %v1460, %v1549
        %v1551 = vpop.f32.mrf.mxu0
        %1552 = vmatprep.mubr.f32.mxu0 0.0
        %1553 = vmatmul.mubr.f32.gmra.mxu0 %v1471
        %v1554 = vpop.f32.mrf.mxu0
        %v1555 = vadd.f32 %v1460, %v1554
        %v1556 = vpop.f32.mrf.mxu0
        %1557 = vdwg.mxu0
        %v1558 = vmul.f32 %v1540, %v409
        %v1559 = vmul.f32 %v1545, %v411
        %v1560 = vmul.f32 %v1550, %v413
        %v1561 = vmul.f32 %v1555, %v415
        %v1562 = vmul.f32 %v1540, %v417
        %v1563 = vmul.f32 %v1545, %v419
        %v1564 = vmul.f32 %v1550, %v421
        %v1565 = vmul.f32 %v1555, %v423
        %v1566 = vmul.f32 %v1540, %v425
        %v1567 = vmul.f32 %v1545, %v427
        %v1568 = vmul.f32 %v1550, %v429
        %v1569 = vmul.f32 %v1555, %v431
        %v1570 = vmul.f32 %v1540, %v433
        %v1571 = vmul.f32 %v1545, %v435
        %v1572 = vmul.f32 %v1550, %v437
        %v1573 = vmul.f32 %v1555, %v439
        %v1574 = vmul.f32 %v1540, %v473
        %v1575 = vmul.f32 %v1545, %v475
        %v1576 = vmul.f32 %v1550, %v477
        %v1577 = vmul.f32 %v1555, %v479
        %v1578 = vmul.f32 %v1540, %v481
        %v1579 = vmul.f32 %v1545, %v483
        %v1580 = vmul.f32 %v1550, %v485
        %v1581 = vmul.f32 %v1555, %v487
        %v1582 = vmul.f32 %v1540, %v489
        %v1583 = vmul.f32 %v1545, %v491
        %v1584 = vmul.f32 %v1550, %v493
        %v1585 = vmul.f32 %v1555, %v495
        %v1586 = vmul.f32 %v1540, %v497
        %v1587 = vmul.f32 %v1545, %v499
        %v1588 = vmul.f32 %v1550, %v501
        %v1589 = vmul.f32 %v1555, %v503
        %1606 = vrot.lane.b32.xlu0 %v1558, 96
        %v1607 = vpop.permute.xlu0 %1606
        %1608 = vrot.lane.b32.xlu0 %v1559, 96
        %v1609 = vpop.permute.xlu0 %1608
        %1610 = vrot.lane.b32.xlu0 %v1560, 96
        %v1611 = vpop.permute.xlu0 %1610
        %1612 = vrot.lane.b32.xlu0 %v1561, 96
        %v1613 = vpop.permute.xlu0 %1612
        %1614 = vrot.lane.b32.xlu0 %v1562, 96
        %v1615 = vpop.permute.xlu0 %1614
        %1616 = vrot.lane.b32.xlu0 %v1563, 96
        %v1617 = vpop.permute.xlu0 %1616
        %1618 = vrot.lane.b32.xlu0 %v1564, 96
        %v1619 = vpop.permute.xlu0 %1618
        %1620 = vrot.lane.b32.xlu0 %v1565, 96
        %v1621 = vpop.permute.xlu0 %1620
        %1622 = vrot.lane.b32.xlu0 %v1566, 96
        %v1623 = vpop.permute.xlu0 %1622
        %1624 = vrot.lane.b32.xlu0 %v1567, 96
        %v1625 = vpop.permute.xlu0 %1624
        %1626 = vrot.lane.b32.xlu0 %v1568, 96
        %v1627 = vpop.permute.xlu0 %1626
        %1628 = vrot.lane.b32.xlu0 %v1569, 96
        %v1629 = vpop.permute.xlu0 %1628
        %1630 = vrot.lane.b32.xlu0 %v1570, 96
        %v1631 = vpop.permute.xlu0 %1630
        %1632 = vrot.lane.b32.xlu0 %v1571, 96
        %v1633 = vpop.permute.xlu0 %1632
        %1634 = vrot.lane.b32.xlu0 %v1572, 96
        %v1635 = vpop.permute.xlu0 %1634
        %1636 = vrot.lane.b32.xlu0 %v1573, 96
        %v1637 = vpop.permute.xlu0 %1636
        %v1639 = vsel %vm180, %v1540, 0
        %v1642 = vsel %vm180, %v1545, 0
        %v1645 = vsel %vm180, %v1550, 0
        %v1648 = vsel %vm180, %v1555, 0
        %v1650 = vsel %vm180, %v1607, 0
        %v1652 = vsel %vm180, %v1609, 0
        %v1654 = vsel %vm180, %v1611, 0
        %v1656 = vsel %vm180, %v1613, 0
        %v1658 = vsel %vm180, %v1615, 0
        %v1660 = vsel %vm180, %v1617, 0
        %v1662 = vsel %vm180, %v1619, 0
        %v1664 = vsel %vm180, %v1621, 0
        %v1666 = vsel %vm180, %v1623, 0
        %v1668 = vsel %vm180, %v1625, 0
        %v1670 = vsel %vm180, %v1627, 0
        %v1672 = vsel %vm180, %v1629, 0
        %v1674 = vsel %vm180, %v1631, 0
        %v1676 = vsel %vm180, %v1633, 0
        %v1678 = vsel %vm180, %v1635, 0
        %v1680 = vsel %vm180, %v1637, 0
        %1682 = vmatprep.subr.mxu0 0.0
        %1683 = vmatpush1.xpose.msra.mxu0 %v1680
        %1684 = vmatprep.subr.mxu0 0.0
        %1685 = vmatpush1.xpose.msra.mxu0 %v1678
        %1686 = vmatprep.subr.mxu0 0.0
        %1687 = vmatpush1.xpose.msra.mxu0 %v1676
        %1688 = vmatprep.subr.mxu0 0.0
        %1689 = vmatpush1.xpose.msra.mxu0 %v1674
        %1690 = vmatprep.subr.mxu0 0.0
        %1691 = vmatpush1.xpose.msra.mxu0 %v1672
        %1692 = vmatprep.subr.mxu0 0.0
        %1693 = vmatpush1.xpose.msra.mxu0 %v1670
        %1694 = vmatprep.subr.mxu0 0.0
        %1695 = vmatpush1.xpose.msra.mxu0 %v1668
        %1696 = vmatprep.subr.mxu0 0.0
        %1697 = vmatpush1.xpose.msra.mxu0 %v1666
        %1698 = vmatprep.subr.mxu0 0.0
        %1699 = vmatpush1.xpose.msra.mxu0 %v1664
        %1700 = vmatprep.subr.mxu0 0.0
        %1701 = vmatpush1.xpose.msra.mxu0 %v1662
        %1702 = vmatprep.subr.mxu0 0.0
        %1703 = vmatpush1.xpose.msra.mxu0 %v1660
        %1704 = vmatprep.subr.mxu0 0.0
        %1705 = vmatpush1.xpose.msra.mxu0 %v1658
        %1706 = vmatprep.subr.mxu0 0.0
        %1707 = vmatpush1.xpose.msra.mxu0 %v1656
        %1708 = vmatprep.subr.mxu0 0.0
        %1709 = vmatpush1.xpose.msra.mxu0 %v1654
        %1710 = vmatprep.subr.mxu0 0.0
        %1711 = vmatpush1.xpose.msra.mxu0 %v1652
        %1712 = vmatprep.subr.mxu0 0.0
        %1713 = vmatpush1.xpose.msra.mxu0 %v1650
        %1714 = vmatprep.subr.mxu0 0.0
        %1715 = vmatpush2.xpose.msra.mxu0 0.0
        %1716 = vmatprep.subr.mxu0 0.0
        %1717 = vmatpush2.xpose.msra.mxu0 0.0
        %1718 = vmatprep.subr.mxu0 0.0
        %1719 = vmatpush2.xpose.msra.mxu0 0.0
        %1720 = vmatprep.subr.mxu0 0.0
        %1721 = vmatpush2.xpose.msra.mxu0 0.0
        %1722 = vmatprep.subr.mxu0 0.0
        %1723 = vmatpush2.xpose.msra.mxu0 0.0
        %1724 = vmatprep.subr.mxu0 0.0
        %1725 = vmatpush2.xpose.msra.mxu0 0.0
        %1726 = vmatprep.subr.mxu0 0.0
        %1727 = vmatpush2.xpose.msra.mxu0 0.0
        %1728 = vmatprep.subr.mxu0 0.0
        %1729 = vmatpush2.xpose.msra.mxu0 0.0
        %1730 = vmatprep.subr.mxu0 0.0
        %1731 = vmatpush2.xpose.msra.mxu0 0.0
        %1732 = vmatprep.subr.mxu0 0.0
        %1733 = vmatpush2.xpose.msra.mxu0 0.0
        %1734 = vmatprep.subr.mxu0 0.0
        %1735 = vmatpush2.xpose.msra.mxu0 0.0
        %1736 = vmatprep.subr.mxu0 0.0
        %1737 = vmatpush2.xpose.msra.mxu0 0.0
        %1738 = vmatprep.subr.mxu0 0.0
        %1739 = vmatpush2.xpose.msra.mxu0 0.0
        %1740 = vmatprep.subr.mxu0 0.0
        %1741 = vmatpush2.xpose.msra.mxu0 0.0
        %1742 = vmatprep.subr.mxu0 0.0
        %1743 = vmatpush2.xpose.msra.mxu0 0.0
        %1744 = vmatprep.subr.mxu0 0.0
        %1745 = vmatpush2.xpose.msra.mxu0 0.0
        %1746 = vmatprep.mubr.f32.mxu0 0.0
        %1747 = vmatmul.mubr.f32.gmra.mxu0 %v1639
        %v1748 = vpop.f32.mrf.mxu0
        %v1749 = vadd.f32 0.0, %v1748
        %v1750 = vpop.f32.mrf.mxu0
        %1751 = vmatprep.mubr.f32.mxu0 0.0
        %1752 = vmatmul.mubr.f32.gmra.mxu0 %v1642
        %v1753 = vpop.f32.mrf.mxu0
        %v1754 = vadd.f32 0.0, %v1753
        %v1755 = vpop.f32.mrf.mxu0
        %1756 = vmatprep.mubr.f32.mxu0 0.0
        %1757 = vmatmul.mubr.f32.gmra.mxu0 %v1645
        %v1758 = vpop.f32.mrf.mxu0
        %v1759 = vadd.f32 0.0, %v1758
        %v1760 = vpop.f32.mrf.mxu0
        %1761 = vmatprep.mubr.f32.mxu0 0.0
        %1762 = vmatmul.mubr.f32.gmra.mxu0 %v1648
        %v1763 = vpop.f32.mrf.mxu0
        %v1764 = vadd.f32 0.0, %v1763
        %v1765 = vpop.f32.mrf.mxu0
        %1766 = vdwg.mxu0
        %1767 = vmax.xlane.f32.xlu0 %v1749
        %v1768 = vpop.xlane.xlu0 %1767
        %1769 = vmax.xlane.f32.xlu0 %v1754
        %v1770 = vpop.xlane.xlu0 %1769
        %1771 = vmax.xlane.f32.xlu0 %v1759
        %v1772 = vpop.xlane.xlu0 %1771
        %1773 = vmax.xlane.f32.xlu0 %v1764
        %v1774 = vpop.xlane.xlu0 %1773
        %v1775 = vsub.f32 %v1749, %v1768
        %v1776 = vsub.f32 %v1754, %v1770
        %v1777 = vsub.f32 %v1759, %v1772
        %v1778 = vsub.f32 %v1764, %v1774
        %v1779 = vmul.f32 %v1775, 1.442695
        %v1780 = vpow.pop %v1779
        %v1781 = vmul.f32 %v1776, 1.442695
        %v1782 = vpow.pop %v1781
        %v1783 = vmul.f32 %v1777, 1.442695
        %v1784 = vpow.pop %v1783
        %v1785 = vmul.f32 %v1778, 1.442695
        %v1786 = vpow.pop %v1785
        %1803 = vrot.lane.b32.xlu0 %v1574, 64
        %v1804 = vpop.permute.xlu0 %1803
        %1805 = vrot.lane.b32.xlu0 %v1575, 64
        %v1806 = vpop.permute.xlu0 %1805
        %1807 = vrot.lane.b32.xlu0 %v1576, 64
        %v1808 = vpop.permute.xlu0 %1807
        %1809 = vrot.lane.b32.xlu0 %v1577, 64
        %v1810 = vpop.permute.xlu0 %1809
        %1811 = vrot.lane.b32.xlu0 %v1578, 64
        %v1812 = vpop.permute.xlu0 %1811
        %1813 = vrot.lane.b32.xlu0 %v1579, 64
        %v1814 = vpop.permute.xlu0 %1813
        %1815 = vrot.lane.b32.xlu0 %v1580, 64
        %v1816 = vpop.permute.xlu0 %1815
        %1817 = vrot.lane.b32.xlu0 %v1581, 64
        %v1818 = vpop.permute.xlu0 %1817
        %1819 = vrot.lane.b32.xlu0 %v1582, 64
        %v1820 = vpop.permute.xlu0 %1819
        %1821 = vrot.lane.b32.xlu0 %v1583, 64
        %v1822 = vpop.permute.xlu0 %1821
        %1823 = vrot.lane.b32.xlu0 %v1584, 64
        %v1824 = vpop.permute.xlu0 %1823
        %1825 = vrot.lane.b32.xlu0 %v1585, 64
        %v1826 = vpop.permute.xlu0 %1825
        %1827 = vrot.lane.b32.xlu0 %v1586, 64
        %v1828 = vpop.permute.xlu0 %1827
        %1829 = vrot.lane.b32.xlu0 %v1587, 64
        %v1830 = vpop.permute.xlu0 %1829
        %1831 = vrot.lane.b32.xlu0 %v1588, 64
        %v1832 = vpop.permute.xlu0 %1831
        %1833 = vrot.lane.b32.xlu0 %v1589, 64
        %v1834 = vpop.permute.xlu0 %1833
        %1851 = vmatprep.subr.mxu0 0.0
        %1852 = vmatpush1.msra.mxu0 %v1834
        %1853 = vmatprep.subr.mxu0 0.0
        %1854 = vmatpush1.msra.mxu0 %v1832
        %1855 = vmatprep.subr.mxu0 0.0
        %1856 = vmatpush1.msra.mxu0 %v1830
        %1857 = vmatprep.subr.mxu0 0.0
        %1858 = vmatpush1.msra.mxu0 %v1828
        %1859 = vmatprep.subr.mxu0 0.0
        %1860 = vmatpush1.msra.mxu0 %v1826
        %1861 = vmatprep.subr.mxu0 0.0
        %1862 = vmatpush1.msra.mxu0 %v1824
        %1863 = vmatprep.subr.mxu0 0.0
        %1864 = vmatpush1.msra.mxu0 %v1822
        %1865 = vmatprep.subr.mxu0 0.0
        %1866 = vmatpush1.msra.mxu0 %v1820
        %1867 = vmatprep.subr.mxu0 0.0
        %1868 = vmatpush1.msra.mxu0 %v1818
        %1869 = vmatprep.subr.mxu0 0.0
        %1870 = vmatpush1.msra.mxu0 %v1816
        %1871 = vmatprep.subr.mxu0 0.0
        %1872 = vmatpush1.msra.mxu0 %v1814
        %1873 = vmatprep.subr.mxu0 0.0
        %1874 = vmatpush1.msra.mxu0 %v1812
        %1875 = vmatprep.subr.mxu0 0.0
        %1876 = vmatpush1.msra.mxu0 %v1810
        %1877 = vmatprep.subr.mxu0 0.0
        %1878 = vmatpush1.msra.mxu0 %v1808
        %1879 = vmatprep.subr.mxu0 0.0
        %1880 = vmatpush1.msra.mxu0 %v1806
        %1881 = vmatprep.subr.mxu0 0.0
        %1882 = vmatpush1.msra.mxu0 %v1804
        %1883 = vmatprep.subr.mxu0 0.0
        %1884 = vmatpush2.msra.mxu0 0.0
        %1885 = vmatprep.subr.mxu0 0.0
        %1886 = vmatpush2.msra.mxu0 0.0
        %1887 = vmatprep.subr.mxu0 0.0
        %1888 = vmatpush2.msra.mxu0 0.0
        %1889 = vmatprep.subr.mxu0 0.0
        %1890 = vmatpush2.msra.mxu0 0.0
        %1891 = vmatprep.subr.mxu0 0.0
        %1892 = vmatpush2.msra.mxu0 0.0
        %1893 = vmatprep.subr.mxu0 0.0
        %1894 = vmatpush2.msra.mxu0 0.0
        %1895 = vmatprep.subr.mxu0 0.0
        %1896 = vmatpush2.msra.mxu0 0.0
        %1897 = vmatprep.subr.mxu0 0.0
        %1898 = vmatpush2.msra.mxu0 0.0
        %1899 = vmatprep.subr.mxu0 0.0
        %1900 = vmatpush2.msra.mxu0 0.0
        %1901 = vmatprep.subr.mxu0 0.0
        %1902 = vmatpush2.msra.mxu0 0.0
        %1903 = vmatprep.subr.mxu0 0.0
        %1904 = vmatpush2.msra.mxu0 0.0
        %1905 = vmatprep.subr.mxu0 0.0
        %1906 = vmatpush2.msra.mxu0 0.0
        %1907 = vmatprep.subr.mxu0 0.0
        %1908 = vmatpush2.msra.mxu0 0.0
        %1909 = vmatprep.subr.mxu0 0.0
        %1910 = vmatpush2.msra.mxu0 0.0
        %1911 = vmatprep.subr.mxu0 0.0
        %1912 = vmatpush2.msra.mxu0 0.0
        %1913 = vmatprep.subr.mxu0 0.0
        %1914 = vmatpush2.msra.mxu0 0.0
        %1915 = vmatprep.mubr.f32.mxu0 0.0
        %1916 = vmatmul.mubr.f32.gmra.mxu0 %v1780
        %v1917 = vpop.f32.mrf.mxu0
        %v1918 = vadd.f32 0.0, %v1917
        %v1919 = vpop.f32.mrf.mxu0
        %1920 = vmatprep.mubr.f32.mxu0 0.0
        %1921 = vmatmul.mubr.f32.gmra.mxu0 %v1782
        %v1922 = vpop.f32.mrf.mxu0
        %v1923 = vadd.f32 0.0, %v1922
        %v1924 = vpop.f32.mrf.mxu0
        %1925 = vmatprep.mubr.f32.mxu0 0.0
        %1926 = vmatmul.mubr.f32.gmra.mxu0 %v1784
        %v1927 = vpop.f32.mrf.mxu0
        %v1928 = vadd.f32 0.0, %v1927
        %v1929 = vpop.f32.mrf.mxu0
        %1930 = vmatprep.mubr.f32.mxu0 0.0
        %1931 = vmatmul.mubr.f32.gmra.mxu0 %v1786
        %v1932 = vpop.f32.mrf.mxu0
        %v1933 = vadd.f32 0.0, %v1932
        %v1934 = vpop.f32.mrf.mxu0
        %1935 = vdwg.mxu0
        %1936 = vmatprep.subr.mxu0 0.0
        %1937 = vmatpush1.msra.mxu0 %v171
        %1938 = vmatprep.subr.mxu0 0.0
        %1939 = vmatpush1.msra.mxu0 %v170
        %1940 = vmatprep.subr.mxu0 0.0
        %1941 = vmatpush1.msra.mxu0 %v169
        %1942 = vmatprep.subr.mxu0 0.0
        %1943 = vmatpush1.msra.mxu0 %v168
        %1944 = vmatprep.subr.mxu0 0.0
        %1945 = vmatpush1.msra.mxu0 %v167
        %1946 = vmatprep.subr.mxu0 0.0
        %1947 = vmatpush1.msra.mxu0 %v166
        %1948 = vmatprep.subr.mxu0 0.0
        %1949 = vmatpush1.msra.mxu0 %v165
        %1950 = vmatprep.subr.mxu0 0.0
        %1951 = vmatpush1.msra.mxu0 %v164
        %1952 = vmatprep.subr.mxu0 0.0
        %1953 = vmatpush1.msra.mxu0 %v163
        %1954 = vmatprep.subr.mxu0 0.0
        %1955 = vmatpush1.msra.mxu0 %v162
        %1956 = vmatprep.subr.mxu0 0.0
        %1957 = vmatpush1.msra.mxu0 %v161
        %1958 = vmatprep.subr.mxu0 0.0
        %1959 = vmatpush1.msra.mxu0 %v160
        %1960 = vmatprep.subr.mxu0 0.0
        %1961 = vmatpush1.msra.mxu0 %v159
        %1962 = vmatprep.subr.mxu0 0.0
        %1963 = vmatpush1.msra.mxu0 %v158
        %1964 = vmatprep.subr.mxu0 0.0
        %1965 = vmatpush1.msra.mxu0 %v157
        %1966 = vmatprep.subr.mxu0 0.0
        %1967 = vmatpush1.msra.mxu0 %v156
        %1968 = vmatprep.subr.mxu0 0.0
        %1969 = vmatpush2.msra.mxu0 0.0
        %1970 = vmatprep.subr.mxu0 0.0
        %1971 = vmatpush2.msra.mxu0 0.0
        %1972 = vmatprep.subr.mxu0 0.0
        %1973 = vmatpush2.msra.mxu0 0.0
        %1974 = vmatprep.subr.mxu0 0.0
        %1975 = vmatpush2.msra.mxu0 0.0
        %1976 = vmatprep.subr.mxu0 0.0
        %1977 = vmatpush2.msra.mxu0 0.0
        %1978 = vmatprep.subr.mxu0 0.0
        %1979 = vmatpush2.msra.mxu0 0.0
        %1980 = vmatprep.subr.mxu0 0.0
        %1981 = vmatpush2.msra.mxu0 0.0
        %1982 = vmatprep.subr.mxu0 0.0
        %1983 = vmatpush2.msra.mxu0 0.0
        %1984 = vmatprep.subr.mxu0 0.0
        %1985 = vmatpush2.msra.mxu0 0.0
        %1986 = vmatprep.subr.mxu0 0.0
        %1987 = vmatpush2.msra.mxu0 0.0
        %1988 = vmatprep.subr.mxu0 0.0
        %1989 = vmatpush2.msra.mxu0 0.0
        %1990 = vmatprep.subr.mxu0 0.0
        %1991 = vmatpush2.msra.mxu0 0.0
        %1992 = vmatprep.subr.mxu0 0.0
        %1993 = vmatpush2.msra.mxu0 0.0
        %1994 = vmatprep.subr.mxu0 0.0
        %1995 = vmatpush2.msra.mxu0 0.0
        %1996 = vmatprep.subr.mxu0 0.0
        %1997 = vmatpush2.msra.mxu0 0.0
        %1998 = vmatprep.subr.mxu0 0.0
        %1999 = vmatpush2.msra.mxu0 0.0
        %2000 = vmatprep.mubr.f32.mxu0 0.0
        %2001 = vmatmul.mubr.f32.gmra.mxu0 %v1780
        %v2002 = vpop.f32.mrf.mxu0
        %v2003 = vadd.f32 0.0, %v2002
        %v2004 = vpop.f32.mrf.mxu0
        %2005 = vmatprep.mubr.f32.mxu0 0.0
        %2006 = vmatmul.mubr.f32.gmra.mxu0 %v1782
        %v2007 = vpop.f32.mrf.mxu0
        %v2008 = vadd.f32 0.0, %v2007
        %v2009 = vpop.f32.mrf.mxu0
        %2010 = vmatprep.mubr.f32.mxu0 0.0
        %2011 = vmatmul.mubr.f32.gmra.mxu0 %v1784
        %v2012 = vpop.f32.mrf.mxu0
        %v2013 = vadd.f32 0.0, %v2012
        %v2014 = vpop.f32.mrf.mxu0
        %2015 = vmatprep.mubr.f32.mxu0 0.0
        %2016 = vmatmul.mubr.f32.gmra.mxu0 %v1786
        %v2017 = vpop.f32.mrf.mxu0
        %v2018 = vadd.f32 0.0, %v2017
        %v2019 = vpop.f32.mrf.mxu0
        %2020 = vdwg.mxu0
        %v2021 = vrcp.pop %v2003
        %v2022 = vrcp.pop %v2008
        %v2023 = vrcp.pop %v2013
        %v2024 = vrcp.pop %v2018
        %v2025 = vmul.f32 %v1918, %v2021
        %v2026 = vmul.f32 %v1923, %v2022
        %v2027 = vmul.f32 %v1928, %v2023
        %v2028 = vmul.f32 %v1933, %v2024
        %v2029 = vld [vmem:[#allocation2 + $0x160] sm:$0xff]
        %v2030 = vld [vmem:[#allocation2 + $0x168] sm:$0xff]
        %v2031 = vld [vmem:[#allocation2 + $0x170] sm:$0xff]
        %v2032 = vld [vmem:[#allocation2 + $0x178] sm:$0xff]
        %v2033 = vlaneseq
        %v2034 = vshrl.u32 %v2033, 7
        %v2035 = vsub.s32 1, %v2034
        %v2036 = vrot.slane %v1452, %v2035
        %v2038 = vsel %vm180, %v2025, 0
        %v2041 = vsel %vm180, %v2026, 0
        %v2044 = vsel %vm180, %v2027, 0
        %v2047 = vsel %vm180, %v2028, 0
        %2049 = vmatprep.subr.mxu0 0.0
        %2050 = vmatpush1.msra.mxu0 0.0
        %2051 = vmatprep.subr.mxu0 0.0
        %2052 = vmatpush1.msra.mxu0 0.0
        %2053 = vmatprep.subr.mxu0 0.0
        %2054 = vmatpush1.msra.mxu0 0.0
        %2055 = vmatprep.subr.mxu0 0.0
        %2056 = vmatpush1.msra.mxu0 0.0
        %2057 = vmatprep.subr.mxu0 0.0
        %2058 = vmatpush1.msra.mxu0 0.0
        %2059 = vmatprep.subr.mxu0 0.0
        %2060 = vmatpush1.msra.mxu0 0.0
        %2061 = vmatprep.subr.mxu0 0.0
        %2062 = vmatpush1.msra.mxu0 0.0
        %2063 = vmatprep.subr.mxu0 0.0
        %2064 = vmatpush1.msra.mxu0 0.0
        %2065 = vmatprep.subr.mxu0 0.0
        %2066 = vmatpush1.msra.mxu0 0.0
        %2067 = vmatprep.subr.mxu0 0.0
        %2068 = vmatpush1.msra.mxu0 0.0
        %2069 = vmatprep.subr.mxu0 0.0
        %2070 = vmatpush1.msra.mxu0 0.0
        %2071 = vmatprep.subr.mxu0 0.0
        %2072 = vmatpush1.msra.mxu0 0.0
        %2073 = vmatprep.subr.mxu0 0.0
        %2074 = vmatpush1.msra.mxu0 %v2032
        %2075 = vmatprep.subr.mxu0 0.0
        %2076 = vmatpush1.msra.mxu0 %v2031
        %2077 = vmatprep.subr.mxu0 0.0
        %2078 = vmatpush1.msra.mxu0 %v2030
        %2079 = vmatprep.subr.mxu0 0.0
        %2080 = vmatpush1.msra.mxu0 %v2029
        %2081 = vmatprep.subr.mxu0 0.0
        %2082 = vmatpush2.msra.mxu0 0.0
        %2083 = vmatprep.subr.mxu0 0.0
        %2084 = vmatpush2.msra.mxu0 0.0
        %2085 = vmatprep.subr.mxu0 0.0
        %2086 = vmatpush2.msra.mxu0 0.0
        %2087 = vmatprep.subr.mxu0 0.0
        %2088 = vmatpush2.msra.mxu0 0.0
        %2089 = vmatprep.subr.mxu0 0.0
        %2090 = vmatpush2.msra.mxu0 0.0
        %2091 = vmatprep.subr.mxu0 0.0
        %2092 = vmatpush2.msra.mxu0 0.0
        %2093 = vmatprep.subr.mxu0 0.0
        %2094 = vmatpush2.msra.mxu0 0.0
        %2095 = vmatprep.subr.mxu0 0.0
        %2096 = vmatpush2.msra.mxu0 0.0
        %2097 = vmatprep.subr.mxu0 0.0
        %2098 = vmatpush2.msra.mxu0 0.0
        %2099 = vmatprep.subr.mxu0 0.0
        %2100 = vmatpush2.msra.mxu0 0.0
        %2101 = vmatprep.subr.mxu0 0.0
        %2102 = vmatpush2.msra.mxu0 0.0
        %2103 = vmatprep.subr.mxu0 0.0
        %2104 = vmatpush2.msra.mxu0 0.0
        %2105 = vmatprep.subr.mxu0 0.0
        %2106 = vmatpush2.msra.mxu0 0.0
        %2107 = vmatprep.subr.mxu0 0.0
        %2108 = vmatpush2.msra.mxu0 0.0
        %2109 = vmatprep.subr.mxu0 0.0
        %2110 = vmatpush2.msra.mxu0 0.0
        %2111 = vmatprep.subr.mxu0 0.0
        %2112 = vmatpush2.msra.mxu0 0.0
        %2113 = vmatprep.mubr.f32.mxu0 0.0
        %2114 = vmatmul.mubr.f32.gmra.mxu0 %v2038
        %v2115 = vpop.f32.mrf.mxu0
        %v2116 = vadd.f32 %v2036, %v2115
        %v2117 = vpop.f32.mrf.mxu0
        %2118 = vmatprep.mubr.f32.mxu0 0.0
        %2119 = vmatmul.mubr.f32.gmra.mxu0 %v2041
        %v2120 = vpop.f32.mrf.mxu0
        %v2121 = vadd.f32 %v2036, %v2120
        %v2122 = vpop.f32.mrf.mxu0
        %2123 = vmatprep.mubr.f32.mxu0 0.0
        %2124 = vmatmul.mubr.f32.gmra.mxu0 %v2044
        %v2125 = vpop.f32.mrf.mxu0
        %v2126 = vadd.f32 %v2036, %v2125
        %v2127 = vpop.f32.mrf.mxu0
        %2128 = vmatprep.mubr.f32.mxu0 0.0
        %2129 = vmatmul.mubr.f32.gmra.mxu0 %v2047
        %v2130 = vpop.f32.mrf.mxu0
        %v2131 = vadd.f32 %v2036, %v2130
        %v2132 = vpop.f32.mrf.mxu0
        %2133 = vdwg.mxu0
        %v2134 = vadd.f32 %v1448, %v2116
        %v2135 = vadd.f32 %v1449, %v2121
        %v2136 = vadd.f32 %v1450, %v2126
        %v2137 = vadd.f32 %v1451, %v2131
        %v2138 = vsel %vm180, %v2134, 0.0
        %2139 = vadd.xlane.f32.xlu0 %v2138
        %v2140 = vpop.xlane.xlu0 %2139
        %v2141 = vsel %vm180, %v2135, 0.0
        %2142 = vadd.xlane.f32.xlu0 %v2141
        %v2143 = vpop.xlane.xlu0 %2142
        %v2144 = vsel %vm180, %v2136, 0.0
        %2145 = vadd.xlane.f32.xlu0 %v2144
        %v2146 = vpop.xlane.xlu0 %2145
        %v2147 = vsel %vm180, %v2137, 0.0
        %2148 = vadd.xlane.f32.xlu0 %v2147
        %v2149 = vpop.xlane.xlu0 %2148
        %v2150 = vmul.f32 %v2140, %v1096
        %v2151 = vmul.f32 %v2143, %v1096
        %v2152 = vmul.f32 %v2146, %v1096
        %v2153 = vmul.f32 %v2149, %v1096
        %v2154 = vsub.f32 %v2134, %v2150
        %v2155 = vsub.f32 %v2135, %v2151
        %v2156 = vsub.f32 %v2136, %v2152
        %v2157 = vsub.f32 %v2137, %v2153
        %v2158 = vmul.f32 %v2154, %v2154
        %v2159 = vmul.f32 %v2155, %v2155
        %v2160 = vmul.f32 %v2156, %v2156
        %v2161 = vmul.f32 %v2157, %v2157
        %v2162 = vsel %vm180, %v2158, 0.0
        %2163 = vadd.xlane.f32.xlu0 %v2162
        %v2164 = vpop.xlane.xlu0 %2163
        %v2165 = vsel %vm180, %v2159, 0.0
        %2166 = vadd.xlane.f32.xlu0 %v2165
        %v2167 = vpop.xlane.xlu0 %2166
        %v2168 = vsel %vm180, %v2160, 0.0
        %2169 = vadd.xlane.f32.xlu0 %v2168
        %v2170 = vpop.xlane.xlu0 %2169
        %v2171 = vsel %vm180, %v2161, 0.0
        %2172 = vadd.xlane.f32.xlu0 %v2171
        %v2173 = vpop.xlane.xlu0 %2172
        %v2174 = vmul.f32 %v2164, %v1096
        %v2175 = vmul.f32 %v2167, %v1096
        %v2176 = vmul.f32 %v2170, %v1096
        %v2177 = vmul.f32 %v2173, %v1096
        %v2178 = vadd.f32 %v2174, 1e-05
        %v2179 = vadd.f32 %v2175, 1e-05
        %v2180 = vadd.f32 %v2176, 1e-05
        %v2181 = vadd.f32 %v2177, 1e-05
        %v2182 = vrsqrt.pop %v2178
        %v2183 = vrsqrt.pop %v2179
        %v2184 = vrsqrt.pop %v2180
        %v2185 = vrsqrt.pop %v2181
        %v2186 = vmul.f32 %v2154, %v2182
        %v2187 = vmul.f32 %v2155, %v2183
        %v2188 = vmul.f32 %v2156, %v2184
        %v2189 = vmul.f32 %v2157, %v2185
        %v2190 = vlaneseq
        %v2191 = vshrl.u32 %v2190, 7
        %v2192 = vsub.s32 2, %v2191
        %v2193 = vrot.slane %v1452, %v2192
        %v2194 = vmul.f32 %v2186, %v2193
        %v2195 = vmul.f32 %v2187, %v2193
        %v2196 = vmul.f32 %v2188, %v2193
        %v2197 = vmul.f32 %v2189, %v2193
        %v2198 = vlaneseq
        %v2199 = vshrl.u32 %v2198, 7
        %v2200 = vsub.s32 3, %v2199
        %v2201 = vrot.slane %v1452, %v2200
        %v2202 = vadd.f32 %v2194, %v2201
        %v2203 = vadd.f32 %v2195, %v2201
        %v2204 = vadd.f32 %v2196, %v2201
        %v2205 = vadd.f32 %v2197, %v2201
        %v2206 = vld [vmem:[#allocation2 + $0x180] sm:$0xff]
        %v2207 = vld [vmem:[#allocation2 + $0x188] sm:$0xff]
        %v2208 = vld [vmem:[#allocation2 + $0x190] sm:$0xff]
        %v2209 = vld [vmem:[#allocation2 + $0x198] sm:$0xff]
        %v2210 = vlaneseq
        %v2211 = vshrl.u32 %v2210, 7
        %v2212 = vsub.s32 4, %v2211
        %v2213 = vrot.slane %v1452, %v2212
        %v2215 = vsel %vm180, %v2202, 0
        %v2218 = vsel %vm180, %v2203, 0
        %v2221 = vsel %vm180, %v2204, 0
        %v2224 = vsel %vm180, %v2205, 0
        %2226 = vmatprep.subr.mxu0 0.0
        %2227 = vmatpush1.msra.mxu0 0.0
        %2228 = vmatprep.subr.mxu0 0.0
        %2229 = vmatpush1.msra.mxu0 0.0
        %2230 = vmatprep.subr.mxu0 0.0
        %2231 = vmatpush1.msra.mxu0 0.0
        %2232 = vmatprep.subr.mxu0 0.0
        %2233 = vmatpush1.msra.mxu0 0.0
        %2234 = vmatprep.subr.mxu0 0.0
        %2235 = vmatpush1.msra.mxu0 0.0
        %2236 = vmatprep.subr.mxu0 0.0
        %2237 = vmatpush1.msra.mxu0 0.0
        %2238 = vmatprep.subr.mxu0 0.0
        %2239 = vmatpush1.msra.mxu0 0.0
        %2240 = vmatprep.subr.mxu0 0.0
        %2241 = vmatpush1.msra.mxu0 0.0
        %2242 = vmatprep.subr.mxu0 0.0
        %2243 = vmatpush1.msra.mxu0 0.0
        %2244 = vmatprep.subr.mxu0 0.0
        %2245 = vmatpush1.msra.mxu0 0.0
        %2246 = vmatprep.subr.mxu0 0.0
        %2247 = vmatpush1.msra.mxu0 0.0
        %2248 = vmatprep.subr.mxu0 0.0
        %2249 = vmatpush1.msra.mxu0 0.0
        %2250 = vmatprep.subr.mxu0 0.0
        %2251 = vmatpush1.msra.mxu0 %v2209
        %2252 = vmatprep.subr.mxu0 0.0
        %2253 = vmatpush1.msra.mxu0 %v2208
        %2254 = vmatprep.subr.mxu0 0.0
        %2255 = vmatpush1.msra.mxu0 %v2207
        %2256 = vmatprep.subr.mxu0 0.0
        %2257 = vmatpush1.msra.mxu0 %v2206
        %2258 = vmatprep.subr.mxu0 0.0
        %2259 = vmatpush2.msra.mxu0 0.0
        %2260 = vmatprep.subr.mxu0 0.0
        %2261 = vmatpush2.msra.mxu0 0.0
        %2262 = vmatprep.subr.mxu0 0.0
        %2263 = vmatpush2.msra.mxu0 0.0
        %2264 = vmatprep.subr.mxu0 0.0
        %2265 = vmatpush2.msra.mxu0 0.0
        %2266 = vmatprep.subr.mxu0 0.0
        %2267 = vmatpush2.msra.mxu0 0.0
        %2268 = vmatprep.subr.mxu0 0.0
        %2269 = vmatpush2.msra.mxu0 0.0
        %2270 = vmatprep.subr.mxu0 0.0
        %2271 = vmatpush2.msra.mxu0 0.0
        %2272 = vmatprep.subr.mxu0 0.0
        %2273 = vmatpush2.msra.mxu0 0.0
        %2274 = vmatprep.subr.mxu0 0.0
        %2275 = vmatpush2.msra.mxu0 0.0
        %2276 = vmatprep.subr.mxu0 0.0
        %2277 = vmatpush2.msra.mxu0 0.0
        %2278 = vmatprep.subr.mxu0 0.0
        %2279 = vmatpush2.msra.mxu0 0.0
        %2280 = vmatprep.subr.mxu0 0.0
        %2281 = vmatpush2.msra.mxu0 0.0
        %2282 = vmatprep.subr.mxu0 0.0
        %2283 = vmatpush2.msra.mxu0 0.0
        %2284 = vmatprep.subr.mxu0 0.0
        %2285 = vmatpush2.msra.mxu0 0.0
        %2286 = vmatprep.subr.mxu0 0.0
        %2287 = vmatpush2.msra.mxu0 0.0
        %2288 = vmatprep.subr.mxu0 0.0
        %2289 = vmatpush2.msra.mxu0 0.0
        %2290 = vmatprep.mubr.f32.mxu0 0.0
        %2291 = vmatmul.mubr.f32.gmra.mxu0 %v2215
        %v2292 = vpop.f32.mrf.mxu0
        %v2293 = vadd.f32 %v2213, %v2292
        %v2294 = vpop.f32.mrf.mxu0
        %2295 = vmatprep.mubr.f32.mxu0 0.0
        %2296 = vmatmul.mubr.f32.gmra.mxu0 %v2218
        %v2297 = vpop.f32.mrf.mxu0
        %v2298 = vadd.f32 %v2213, %v2297
        %v2299 = vpop.f32.mrf.mxu0
        %2300 = vmatprep.mubr.f32.mxu0 0.0
        %2301 = vmatmul.mubr.f32.gmra.mxu0 %v2221
        %v2302 = vpop.f32.mrf.mxu0
        %v2303 = vadd.f32 %v2213, %v2302
        %v2304 = vpop.f32.mrf.mxu0
        %2305 = vmatprep.mubr.f32.mxu0 0.0
        %2306 = vmatmul.mubr.f32.gmra.mxu0 %v2224
        %v2307 = vpop.f32.mrf.mxu0
        %v2308 = vadd.f32 %v2213, %v2307
        %v2309 = vpop.f32.mrf.mxu0
        %2310 = vdwg.mxu0
        %v2311 = vmax.f32 %v2293, 0.0
        %v2312 = vmax.f32 %v2298, 0.0
        %v2313 = vmax.f32 %v2303, 0.0
        %v2314 = vmax.f32 %v2308, 0.0
        %v2315 = vld [vmem:[#allocation2 + $0x1a0] sm:$0xff]
        %v2316 = vld [vmem:[#allocation2 + $0x1a8] sm:$0xff]
        %v2317 = vld [vmem:[#allocation2 + $0x1b0] sm:$0xff]
        %v2318 = vld [vmem:[#allocation2 + $0x1b8] sm:$0xff]
        %v2319 = vlaneseq
        %v2320 = vshrl.u32 %v2319, 7
        %v2321 = vsub.s32 5, %v2320
        %v2322 = vrot.slane %v1452, %v2321
        %v2324 = vsel %vm1270, %v2311, 0
        %v2327 = vsel %vm1270, %v2312, 0
        %v2330 = vsel %vm1270, %v2313, 0
        %v2333 = vsel %vm1270, %v2314, 0
        %v2336 = vsel %vm1270, %v2315, 0
        %v2339 = vsel %vm1270, %v2316, 0
        %v2342 = vsel %vm1270, %v2317, 0
        %v2345 = vsel %vm1270, %v2318, 0
        %2347 = vmatprep.subr.mxu0 0.0
        %2348 = vmatpush1.xpose.msra.mxu0 0.0
        %2349 = vmatprep.subr.mxu0 0.0
        %2350 = vmatpush1.xpose.msra.mxu0 0.0
        %2351 = vmatprep.subr.mxu0 0.0
        %2352 = vmatpush1.xpose.msra.mxu0 0.0
        %2353 = vmatprep.subr.mxu0 0.0
        %2354 = vmatpush1.xpose.msra.mxu0 0.0
        %2355 = vmatprep.subr.mxu0 0.0
        %2356 = vmatpush1.xpose.msra.mxu0 0.0
        %2357 = vmatprep.subr.mxu0 0.0
        %2358 = vmatpush1.xpose.msra.mxu0 0.0
        %2359 = vmatprep.subr.mxu0 0.0
        %2360 = vmatpush1.xpose.msra.mxu0 0.0
        %2361 = vmatprep.subr.mxu0 0.0
        %2362 = vmatpush1.xpose.msra.mxu0 0.0
        %2363 = vmatprep.subr.mxu0 0.0
        %2364 = vmatpush1.xpose.msra.mxu0 0.0
        %2365 = vmatprep.subr.mxu0 0.0
        %2366 = vmatpush1.xpose.msra.mxu0 0.0
        %2367 = vmatprep.subr.mxu0 0.0
        %2368 = vmatpush1.xpose.msra.mxu0 0.0
        %2369 = vmatprep.subr.mxu0 0.0
        %2370 = vmatpush1.xpose.msra.mxu0 0.0
        %2371 = vmatprep.subr.mxu0 0.0
        %2372 = vmatpush1.xpose.msra.mxu0 %v2345
        %2373 = vmatprep.subr.mxu0 0.0
        %2374 = vmatpush1.xpose.msra.mxu0 %v2342
        %2375 = vmatprep.subr.mxu0 0.0
        %2376 = vmatpush1.xpose.msra.mxu0 %v2339
        %2377 = vmatprep.subr.mxu0 0.0
        %2378 = vmatpush1.xpose.msra.mxu0 %v2336
        %2379 = vmatprep.subr.mxu0 0.0
        %2380 = vmatpush2.xpose.msra.mxu0 0.0
        %2381 = vmatprep.subr.mxu0 0.0
        %2382 = vmatpush2.xpose.msra.mxu0 0.0
        %2383 = vmatprep.subr.mxu0 0.0
        %2384 = vmatpush2.xpose.msra.mxu0 0.0
        %2385 = vmatprep.subr.mxu0 0.0
        %2386 = vmatpush2.xpose.msra.mxu0 0.0
        %2387 = vmatprep.subr.mxu0 0.0
        %2388 = vmatpush2.xpose.msra.mxu0 0.0
        %2389 = vmatprep.subr.mxu0 0.0
        %2390 = vmatpush2.xpose.msra.mxu0 0.0
        %2391 = vmatprep.subr.mxu0 0.0
        %2392 = vmatpush2.xpose.msra.mxu0 0.0
        %2393 = vmatprep.subr.mxu0 0.0
        %2394 = vmatpush2.xpose.msra.mxu0 0.0
        %2395 = vmatprep.subr.mxu0 0.0
        %2396 = vmatpush2.xpose.msra.mxu0 0.0
        %2397 = vmatprep.subr.mxu0 0.0
        %2398 = vmatpush2.xpose.msra.mxu0 0.0
        %2399 = vmatprep.subr.mxu0 0.0
        %2400 = vmatpush2.xpose.msra.mxu0 0.0
        %2401 = vmatprep.subr.mxu0 0.0
        %2402 = vmatpush2.xpose.msra.mxu0 0.0
        %2403 = vmatprep.subr.mxu0 0.0
        %2404 = vmatpush2.xpose.msra.mxu0 0.0
        %2405 = vmatprep.subr.mxu0 0.0
        %2406 = vmatpush2.xpose.msra.mxu0 0.0
        %2407 = vmatprep.subr.mxu0 0.0
        %2408 = vmatpush2.xpose.msra.mxu0 0.0
        %2409 = vmatprep.subr.mxu0 0.0
        %2410 = vmatpush2.xpose.msra.mxu0 0.0
        %2411 = vmatprep.mubr.f32.mxu0 0.0
        %2412 = vmatmul.mubr.f32.gmra.mxu0 %v2324
        %v2413 = vpop.f32.mrf.mxu0
        %v2414 = vadd.f32 %v2322, %v2413
        %v2415 = vpop.f32.mrf.mxu0
        %2416 = vmatprep.mubr.f32.mxu0 0.0
        %2417 = vmatmul.mubr.f32.gmra.mxu0 %v2327
        %v2418 = vpop.f32.mrf.mxu0
        %v2419 = vpop.f32.mrf.mxu0
        %2420 = vmatprep.mubr.f32.mxu0 0.0
        %2421 = vmatmul.mubr.f32.gmra.mxu0 %v2330
        %v2422 = vpop.f32.mrf.mxu0
        %v2423 = vpop.f32.mrf.mxu0
        %2424 = vmatprep.mubr.f32.mxu0 0.0
        %2425 = vmatmul.mubr.f32.gmra.mxu0 %v2333
        %v2426 = vpop.f32.mrf.mxu0
        %v2427 = vpop.f32.mrf.mxu0
        %2428 = vdwg.mxu0
        %v2429 = vadd.f32 %v2202, %v2414
        %v2430 = vsel %vm180, %v2429, 0.0
        %2431 = vadd.xlane.f32.xlu0 %v2430
        %v2432 = vpop.xlane.xlu0 %2431
        %v2433 = vmul.f32 %v2432, %v1096
        %v2434 = vsub.f32 %v2429, %v2433
        %v2435 = vmul.f32 %v2434, %v2434
        %v2436 = vsel %vm180, %v2435, 0.0
        %2437 = vadd.xlane.f32.xlu0 %v2436
        %v2438 = vpop.xlane.xlu0 %2437
        %v2439 = vmul.f32 %v2438, %v1096
        %v2440 = vadd.f32 %v2439, 1e-05
        %v2441 = vrsqrt.pop %v2440
        %v2442 = vmul.f32 %v2434, %v2441
        %v2443 = vlaneseq
        %v2444 = vshrl.u32 %v2443, 7
        %v2445 = vsub.s32 6, %v2444
        %v2446 = vrot.slane %v1452, %v2445
        %v2447 = vmul.f32 %v2442, %v2446
        %v2448 = vlaneseq
        %v2449 = vshrl.u32 %v2448, 7
        %v2450 = vsub.s32 7, %v2449
        %v2451 = vrot.slane %v1452, %v2450
        %v2452 = vadd.f32 %v2447, %v2451
        %v2453 = vld [vmem:[#allocation2 + $0x1f0] sm:$0xff]
        %v2454 = vsel %vm180, %v2452, 0.0
        %2455 = vadd.xlane.f32.xlu0 %v2454
        %v2456 = vpop.xlane.xlu0 %2455
        %v2457 = vmul.f32 %v2456, %v1096
        %v2458 = vsub.f32 %v2452, %v2457
        %v2459 = vmul.f32 %v2458, %v2458
        %v2460 = vsel %vm180, %v2459, 0.0
        %2461 = vadd.xlane.f32.xlu0 %v2460
        %v2462 = vpop.xlane.xlu0 %2461
        %v2463 = vmul.f32 %v2462, %v1096
        %v2464 = vadd.f32 %v2463, 1e-05
        %v2465 = vrsqrt.pop %v2464
        %v2466 = vmul.f32 %v2458, %v2465
        %v2467 = vlaneseq
        %v2468 = vshrl.u32 %v2467, 7
        %v2469 = vsub.s32 0, %v2468
        %v2470 = vrot.slane %v2453, %v2469
        %v2471 = vmul.f32 %v2466, %v2470
        %v2472 = vlaneseq
        %v2473 = vshrl.u32 %v2472, 7
        %v2474 = vsub.s32 1, %v2473
        %v2475 = vrot.slane %v2453, %v2474
        %v2476 = vadd.f32 %v2471, %v2475
        %v2477 = vld [vmem:[#allocation2 + $0x1c0] sm:$0xff]
        %v2478 = vld [vmem:[#allocation2 + $0x1c8] sm:$0xff]
        %v2479 = vld [vmem:[#allocation2 + $0x1d0] sm:$0xff]
        %v2480 = vld [vmem:[#allocation2 + $0x1d8] sm:$0xff]
        %v2482 = vrot.slane %v2453, 2
        %v2485 = vsel %vm180, %v2476, 0
        %2487 = vmatprep.subr.mxu0 0.0
        %2488 = vmatpush1.msra.mxu0 0.0
        %2489 = vmatprep.subr.mxu0 0.0
        %2490 = vmatpush1.msra.mxu0 0.0
        %2491 = vmatprep.subr.mxu0 0.0
        %2492 = vmatpush1.msra.mxu0 0.0
        %2493 = vmatprep.subr.mxu0 0.0
        %2494 = vmatpush1.msra.mxu0 0.0
        %2495 = vmatprep.subr.mxu0 0.0
        %2496 = vmatpush1.msra.mxu0 0.0
        %2497 = vmatprep.subr.mxu0 0.0
        %2498 = vmatpush1.msra.mxu0 0.0
        %2499 = vmatprep.subr.mxu0 0.0
        %2500 = vmatpush1.msra.mxu0 0.0
        %2501 = vmatprep.subr.mxu0 0.0
        %2502 = vmatpush1.msra.mxu0 0.0
        %2503 = vmatprep.subr.mxu0 0.0
        %2504 = vmatpush1.msra.mxu0 0.0
        %2505 = vmatprep.subr.mxu0 0.0
        %2506 = vmatpush1.msra.mxu0 0.0
        %2507 = vmatprep.subr.mxu0 0.0
        %2508 = vmatpush1.msra.mxu0 0.0
        %2509 = vmatprep.subr.mxu0 0.0
        %2510 = vmatpush1.msra.mxu0 0.0
        %2511 = vmatprep.subr.mxu0 0.0
        %2512 = vmatpush1.msra.mxu0 %v2480
        %2513 = vmatprep.subr.mxu0 0.0
        %2514 = vmatpush1.msra.mxu0 %v2479
        %2515 = vmatprep.subr.mxu0 0.0
        %2516 = vmatpush1.msra.mxu0 %v2478
        %2517 = vmatprep.subr.mxu0 0.0
        %2518 = vmatpush1.msra.mxu0 %v2477
        %2519 = vmatprep.subr.mxu0 0.0
        %2520 = vmatpush2.msra.mxu0 0.0
        %2521 = vmatprep.subr.mxu0 0.0
        %2522 = vmatpush2.msra.mxu0 0.0
        %2523 = vmatprep.subr.mxu0 0.0
        %2524 = vmatpush2.msra.mxu0 0.0
        %2525 = vmatprep.subr.mxu0 0.0
        %2526 = vmatpush2.msra.mxu0 0.0
        %2527 = vmatprep.subr.mxu0 0.0
        %2528 = vmatpush2.msra.mxu0 0.0
        %2529 = vmatprep.subr.mxu0 0.0
        %2530 = vmatpush2.msra.mxu0 0.0
        %2531 = vmatprep.subr.mxu0 0.0
        %2532 = vmatpush2.msra.mxu0 0.0
        %2533 = vmatprep.subr.mxu0 0.0
        %2534 = vmatpush2.msra.mxu0 0.0
        %2535 = vmatprep.subr.mxu0 0.0
        %2536 = vmatpush2.msra.mxu0 0.0
        %2537 = vmatprep.subr.mxu0 0.0
        %2538 = vmatpush2.msra.mxu0 0.0
        %2539 = vmatprep.subr.mxu0 0.0
        %2540 = vmatpush2.msra.mxu0 0.0
        %2541 = vmatprep.subr.mxu0 0.0
        %2542 = vmatpush2.msra.mxu0 0.0
        %2543 = vmatprep.subr.mxu0 0.0
        %2544 = vmatpush2.msra.mxu0 0.0
        %2545 = vmatprep.subr.mxu0 0.0
        %2546 = vmatpush2.msra.mxu0 0.0
        %2547 = vmatprep.subr.mxu0 0.0
        %2548 = vmatpush2.msra.mxu0 0.0
        %2549 = vmatprep.subr.mxu0 0.0
        %2550 = vmatpush2.msra.mxu0 0.0
        %2551 = vmatprep.mubr.f32.mxu0 0.0
        %2552 = vmatmul.mubr.f32.gmra.mxu0 %v2485
        %v2553 = vpop.f32.mrf.mxu0
        %v2554 = vadd.f32 %v2482, %v2553
        %v2555 = vpop.f32.mrf.mxu0
        %2556 = vdwg.mxu0
        %vm2557 = vcmask 253952
        %2558 = vst.msk [vmem:[%s150] sm:$0x1] %vm2557, %v2554
        %s2559 = sand.u32 %s72, 1
        %s2560 = scalar_lea.sflag [#allocation4], %s2559
        %s2561 = sand.u32 %s72, 1
        %s2562 = scalar_lea.vmem [#allocation5], %s2561
        // Predicated region
        $region33: #{forward.1} parent=27 // pred_check
          %p2563 = pneg %p82
        $region34: #{forward.1} parent=27 // pred_check_branch
          %2565 = sbr.rel (%p2563) target = $region36
        $region35: #{forward.1} parent=27 // pred_region
          %s2567 = ssub.s32 16, 16
          %2568 = vsyncadd %s2560, %s2567
          %s2569 = smul.addr %s17, 16
          %s2570 = scalar_lea.hbm %s2, %s2569
          %s2572 = sshll.u32 %s2562, 4
          %s2573 = int_to_ptr.vmem [resolvable:$true] %s2572
          %2575 = dma.vmem_to_hbm [thread:$0]  %s2573, 16, %s2570, %s2560
        $region36: #{forward.1} parent=27 // pred_fallthru
          _
      $region28: #{forward.1} parent=5 // pred_fallthru
        _
      %p2576 = scmp.le.s32.totalorder 2, %s12
      // Predicated region
      $region37: #{forward.1} parent=5 // pred_check
        %p2577 = pneg %p2576
      $region38: #{forward.1} parent=5 // pred_check_branch
        %2579 = sbr.rel (%p2577) target = $region40
      $region39: #{forward.1} parent=5 // pred_region
        %s2580 = ssub.s32 %s12, 2
        // Predicated region
        $region41: #{forward.1} parent=39 // pred_check
          %p2581 = pneg %p88
        $region42: #{forward.1} parent=39 // pred_check_branch
          %2583 = sbr.rel (%p2581) target = $region44
        $region43: #{forward.1} parent=39 // pred_region
          %s2584 = sand.u32 %s73, 1
          %s2585 = scalar_lea.sflag [#allocation4], %s2584
          %s2586 = sand.u32 %s73, 1
          %s2587 = scalar_lea.vmem [#allocation5], %s2586
          %2588 = dma.done %s2585, 16
        $region44: #{forward.1} parent=39 // pred_fallthru
          _
      $region40: #{forward.1} parent=5 // pred_fallthru
        _
    $region6: #{forward.1} parent=1 // loop_footer
      %s16 = sadd.s32 1, %s12
    $region7: #{forward.1} parent=1 // loop_footer_branch
      %11 = sbr.rel target = $region3
    $region8: #{forward.1} parent=1 // loop_exit
      _
    %2589 = vsyncpa [#allocation3], 1
    %s2590 = scalar_lea.sflag [#allocation3], 1
    %2591 = vsyncpa %s2590, 1
    %2592 = vsyncpa [#allocation4], 1
    %s2593 = scalar_lea.sflag [#allocation4], 1
    %2594 = vsyncpa %s2593, 1

</llo_original>
